<compile_context>
chip_gen: v6e
topology: v6e:2x2x1
jax: 0.10.0
libtpu: 0.0.40
codegen_flags: <defaults>
</compile_context>

<pallas_src>
import functools

import jax
import jax.numpy as jnp
from jax.experimental import pallas as pl
from jax.experimental.pallas import tpu as pltpu


def _elu(h):
    # ELU(alpha=1).  The exp argument is clamped so the unselected branch never
    # overflows to inf (benign under where, but trips inf/NaN debug checks).
    return jnp.where(h > 0.0, h, jnp.exp(jnp.minimum(h, 0.0)) - 1.0)


def _round_up(n, m):
    return (n + m - 1) // m * m


def _default_grid_steps():
    """1 grid step on single-TC chips (v5e/v6e); 2 parallel steps on dual-TC."""
    try:
        kind = jax.local_devices()[0].device_kind.lower()
    except Exception:
        return 1
    return 2 if any(tag in kind for tag in ("v7", "v4", "v5p")) else 1


# ----------------------------- parameter packing -----------------------------

def pack_vae_params(enc_params, dec_params, *, z_dim, n_x_est):
    """One-time packing of all Linear (W, b) pairs into two slabs.

    Weights keep the PyTorch (out, in) layout; layer `li` occupies rows
    [row_off, row_off+out) (row blocks padded to multiples of 16 so bf16
    sublane-packing groups stay aligned) and columns [0, in) of a bf16 slab
    whose lane width is padded to 128.  Biases go into a parallel (rows, 1)
    f32 slab.  Returns (w_slab bf16, b_slab f32, meta) with the static
    slicing offsets that get baked into the kernel.
    """
    assert enc_params[-1][0].shape[0] == 2 * z_dim, "encoder head must be 2*z_dim wide"
    assert dec_params[-1][0].shape[0] == 2 * n_x_est, "decoder head must be 2*n_x_est wide"
    assert dec_params[0][0].shape[1] == z_dim

    layers = list(enc_params) + list(dec_params)
    n_enc = len(enc_params)

    row_offs, outs, ins = [], [], []
    r = 0
    for w, _ in layers:
        o, i = int(w.shape[0]), int(w.shape[1])
        row_offs.append(r); outs.append(o); ins.append(i)
        r += _round_up(o, 16)
    n_rows = r
    n_cols = _round_up(max(ins), 128)

    w_slab = jnp.zeros((n_rows, n_cols), jnp.float32)
    b_slab = jnp.zeros((n_rows, 1), jnp.float32)
    for (w, b), r0 in zip(layers, row_offs):
        o, i = int(w.shape[0]), int(w.shape[1])
        w_slab = w_slab.at[r0:r0 + o, :i].set(w.astype(jnp.float32))
        b_slab = b_slab.at[r0:r0 + o, 0].set(b.astype(jnp.float32))
    w_slab = w_slab.astype(jnp.bfloat16)               # MXU-native storage

    meta = dict(x_dim=ins[0], z_dim=int(z_dim), n_x_est=int(n_x_est),
                n_enc=n_enc, n_layers=len(layers),
                row_offs=tuple(row_offs), outs=tuple(outs), ins=tuple(ins))
    return w_slab, b_slab, meta


# --------------------------------- kernel ------------------------------------

def _make_vae_kernel(meta):
    row_offs, outs, ins = meta["row_offs"], meta["outs"], meta["ins"]
    n_enc, n_layers = meta["n_enc"], meta["n_layers"]
    z_dim, n_x_est = meta["z_dim"], meta["n_x_est"]

    def kernel(x_ref, eps_ref, w_ref, b_ref, out_ref):
        def layer(h_bf16, li):
            r0, o, c = row_offs[li], outs[li], ins[li]
            w = w_ref[r0:r0 + o, 0:c]                  # bf16 (o, c), static window
            b = b_ref[r0:r0 + o, :]                    # f32  (o, 1)
            return jnp.dot(w, h_bf16, preferred_element_type=jnp.float32) + b

        # ---- Encoder MLP ----------------------------------------------------
        h = x_ref[...].astype(jnp.bfloat16)            # (x_dim, bb)
        for li in range(n_enc - 1):
            h = _elu(layer(h, li)).astype(jnp.bfloat16)
        z_raw = layer(h, n_enc - 1)                    # (2*z_dim, bb) f32
        z_mean = z_raw[:z_dim, :]
        z_std = jnp.exp(z_raw[z_dim:, :])
        out_ref[0:z_dim, :] = z_mean
        out_ref[z_dim:2 * z_dim, :] = z_std

        # ---- Reparameterize in f32 (matches PyTorch eps*std + mean) ----------
        h = (z_mean + eps_ref[...] * z_std).astype(jnp.bfloat16)   # (z_dim, bb)

        # ---- Decoder MLP ------------------------------------------------------
        for li in range(n_enc, n_layers - 1):
            h = _elu(layer(h, li)).astype(jnp.bfloat16)
        x_raw = layer(h, n_layers - 1)                 # (2*n_x_est, bb) f32
        out_ref[2 * z_dim:2 * z_dim + n_x_est, :] = x_raw[:n_x_est, :]
        out_ref[2 * z_dim + n_x_est:, :] = jnp.exp(x_raw[n_x_est:, :])

    return kernel


# --------------------------------- wrapper -----------------------------------

def vae_forward(x, eps, w_slab, b_slab, *, meta, n_steps=None):
    """Fused dataGeneratorVAE.forward.

    x: (B, x_dim) f32; eps: (B, z_dim) f32 reparameterization noise (the
    module's torch.randn_like, passed explicitly).  w_slab / b_slab / meta come
    from pack_vae_params (done once at init).  Returns (z_mean, z_std, x_pred,
    x_std), batch-major, matching the PyTorch module.
    """
    B, x_dim = x.shape
    z_dim, n_x_est = meta["z_dim"], meta["n_x_est"]
    assert x_dim == meta["x_dim"]
    assert eps.shape == (B, z_dim)
    assert B % 128 == 0, "batch must be a multiple of 128 (lane-dense layout)"

    if n_steps is None:
        n_steps = _default_grid_steps()
    if B % (n_steps * 128) != 0:
        n_steps = 1
    bb = B // n_steps
    out_rows = 2 * z_dim + 2 * n_x_est

    xT, epsT = x.T, eps.T                               # lane-dense (features, B)

    batch_spec = lambda rows: pl.BlockSpec((rows, bb), lambda i: (0, i))
    const_spec = lambda a: pl.BlockSpec(a.shape, lambda i: (0, 0))

    # Advisory cost estimate so XLA schedules sensibly around the custom call.
    elu_rows = sum(meta["outs"]) - meta["outs"][meta["n_enc"] - 1] - meta["outs"][-1]
    cost = pl.CostEstimate(
        flops=2 * B * sum(o * c for o, c in zip(meta["outs"], meta["ins"])),
        transcendentals=B * (elu_rows + z_dim + n_x_est),
        bytes_accessed=(xT.size + epsT.size + out_rows * B) * 4
                       + w_slab.size * 2 + b_slab.size * 4)

    res = pl.pallas_call(
        _make_vae_kernel(meta),
        out_shape=jax.ShapeDtypeStruct((out_rows, B), jnp.float32),
        grid=(n_steps,),
        in_specs=[batch_spec(x_dim), batch_spec(z_dim),
                  const_spec(w_slab), const_spec(b_slab)],
        out_specs=batch_spec(out_rows),
        compiler_params=pltpu.CompilerParams(dimension_semantics=("parallel",)),
        cost_estimate=cost,
    )(xT, epsT, w_slab, b_slab)

    # Split the fused slab back into module-style (B, feature) outputs.
    z_mean = res[:z_dim].T
    z_std = res[z_dim:2 * z_dim].T
    x_pred = res[2 * z_dim:2 * z_dim + n_x_est].T
    x_std = res[2 * z_dim + n_x_est:].T
    return z_mean, z_std, x_pred, x_std


# ----------------------------- references ------------------------------------

def _init_mlp(key, sizes):
    """Deterministic init of a Linear stack; PyTorch (out, in) weight layout."""
    params = []
    for din, dout in zip(sizes[:-1], sizes[1:]):
        key, kw, kb = jax.random.split(key, 3)
        s = float(din) ** -0.5
        w = jax.random.uniform(kw, (dout, din), jnp.float32, -s, s)
        b = jax.random.uniform(kb, (dout,), jnp.float32, -s, s)
        params.append((w, b))
    return params, key


def _reference_forward_f32(x, eps, enc_params, dec_params, z_dim, n_x_est):
    """Pure-f32 reference: exact PyTorch forward() semantics."""
    h = x
    for i, (w, b) in enumerate(enc_params):
        h = h @ w.T + b
        if i < len(enc_params) - 1:
            h = _elu(h)
    z_mean, z_std = h[:, :z_dim], jnp.exp(h[:, z_dim:])
    h = eps * z_std + z_mean
    for i, (w, b) in enumerate(dec_params):
        h = h @ w.T + b
        if i < len(dec_params) - 1:
            h = _elu(h)
    return z_mean, z_std, h[:, :n_x_est], jnp.exp(h[:, n_x_est:])


def _reference_forward_bf16(x, eps, enc_params, dec_params, z_dim, n_x_est):
    """Mirror of the kernel's math: bf16 matmul operands with f32 accumulation;
    bias / ELU / exp / reparameterize in f32."""
    bf = jnp.bfloat16

    def lin(h, w, b):
        return jnp.dot(h.astype(bf), w.astype(bf).T,
                       preferred_element_type=jnp.float32) + b

    h = x
    for i, (w, b) in enumerate(enc_params):
        h = lin(h, w, b)
        if i < len(enc_params) - 1:
            h = _elu(h)
    z_mean, z_std = h[:, :z_dim], jnp.exp(h[:, z_dim:])
    h = z_mean + eps * z_std
    for i, (w, b) in enumerate(dec_params):
        h = lin(h, w, b)
        if i < len(dec_params) - 1:
            h = _elu(h)
    return z_mean, z_std, h[:, :n_x_est], jnp.exp(h[:, n_x_est:])


if __name__ == "__main__":
    # Module hyperparameters (consistent with the PyTorch dataGeneratorVAE).
    x_mode = [0, 0, 2, 3, 0, 2]              # continuous / bernoulli / categorical
    x_dim = len(x_mode)                      # 6
    z_dim = 4
    q_z_nn_layers, q_z_nn_width = 2, 32
    p_x_z_nn_layers, p_x_z_nn_width = 2, 32
    n_x_est = sum(1 if m in (0, 2) else m for m in x_mode)       # 8
    B = 512                                  # lane-dense batch (multiple of 128)

    key = jax.random.PRNGKey(0)
    key, kx, keps = jax.random.split(key, 3)
    x = jax.random.normal(kx, (B, x_dim), jnp.float32)
    eps = jax.random.normal(keps, (B, z_dim), jnp.float32)       # reparam noise

    enc_sizes = [x_dim] + q_z_nn_layers * [q_z_nn_width] + [z_dim * 2]
    dec_sizes = [z_dim] + p_x_z_nn_layers * [p_x_z_nn_width] + [n_x_est * 2]
    enc_params, key = _init_mlp(key, enc_sizes)
    dec_params, key = _init_mlp(key, dec_sizes)

    # One-time parameter packing (hoisted out of the per-call hot path).
    w_slab, b_slab, meta = pack_vae_params(enc_params, dec_params,
                                           z_dim=z_dim, n_x_est=n_x_est)

    n_steps = _default_grid_steps()          # 1 on v5e/v6e, 2 on dual-TC chips
    fwd = jax.jit(functools.partial(vae_forward, meta=meta, n_steps=n_steps))
    out = jax.block_until_ready(fwd(x, eps, w_slab, b_slab))
    z_mean, z_std, x_pred, x_std = out

    assert z_mean.shape == (B, z_dim) and z_std.shape == (B, z_dim)
    assert x_pred.shape == (B, n_x_est) and x_std.shape == (B, n_x_est)

    # Tight check vs a reference that mirrors the kernel's bf16/f32 math.
    ref_bf = _reference_forward_bf16(x, eps, enc_params, dec_params, z_dim, n_x_est)
    for got, want in zip(out, ref_bf):
        assert got.shape == want.shape
        assert jnp.allclose(got, want, atol=1e-2, rtol=1e-2), \
            float(jnp.max(jnp.abs(got - want)))

    # Loose check vs pure-f32 module semantics (differs only by bf16 rounding).
    ref32 = _reference_forward_f32(x, eps, enc_params, dec_params, z_dim, n_x_est)
    for got, want in zip(out, ref32):
        assert jnp.allclose(got, want, atol=1e-1, rtol=1e-1)

    # TODO(synk): sample() (Bernoulli/Categorical/Normal draws over x_mode) is
    # host-side glue outside forward() in the original module; not kernelized.
    print("KERNEL_OK")
</pallas_src>

<mosaic_0001>
module attributes {stable_mosaic.version = 11 : i64} {
  func.func @kernel(%arg0: i32, %arg1: memref<6x512xf32, #tpu.memory_space<vmem>>, %arg2: memref<4x512xf32, #tpu.memory_space<vmem>>, %arg3: memref<160x128xbf16, #tpu.memory_space<vmem>>, %arg4: memref<160x1xf32, #tpu.memory_space<vmem>>, %arg5: memref<24x512xf32, #tpu.memory_space<vmem>>) attributes {dimension_semantics = [#tpu.dimension_semantics<parallel>], iteration_bounds = array<i64: 1>, scalar_prefetch = 0 : i64, scratch_operands = 0 : i64, tpu.core_type = #tpu.core_type<tc>, window_params = [{transform_indices = @transform_0, window_bounds = array<i64: 6, 512>}, {transform_indices = @transform_1, window_bounds = array<i64: 4, 512>}, {pipeline_mode = #tpu.pipeline_mode<synchronous>, transform_indices = @transform_2, window_bounds = array<i64: 160, 128>}, {pipeline_mode = #tpu.pipeline_mode<synchronous>, transform_indices = @transform_3, window_bounds = array<i64: 160, 1>}, {transform_indices = @transform_4, window_bounds = array<i64: 24, 512>}]} {
    %c0 = arith.constant 0 : index
    %c0_0 = arith.constant 0 : index
    %0 = vector.load %arg1[%c0, %c0_0] : memref<6x512xf32, #tpu.memory_space<vmem>>, vector<6x512xf32>
    %1 = arith.truncf %0 : vector<6x512xf32> to vector<6x512xbf16>
    %c0_1 = arith.constant 0 : index
    %c0_2 = arith.constant 0 : index
    %2 = vector.load %arg3[%c0_1, %c0_2] : memref<160x128xbf16, #tpu.memory_space<vmem>>, vector<32x6xbf16>
    %c0_3 = arith.constant 0 : index
    %c0_4 = arith.constant 0 : index
    %3 = vector.load %arg4[%c0_3, %c0_4] : memref<160x1xf32, #tpu.memory_space<vmem>>, vector<32x1xf32>
    %cst = arith.constant dense<0.000000e+00> : vector<32x512xf32>
    %4 = tpu.matmul %2, %1, %cst {dimension_numbers = #tpu.dot_dimension_numbers<[1], [0], [0], [1], [0, 0, 1, 1], [], []>} : vector<32x6xbf16>, vector<6x512xbf16>, vector<32x512xf32> -> vector<32x512xf32>
    %5 = vector.broadcast %3 : vector<32x1xf32> to vector<32x512xf32>
    %6 = arith.addf %4, %5 : vector<32x512xf32>
    %cst_5 = arith.constant 0.000000e+00 : f32
    %7 = vector.broadcast %cst_5 : f32 to vector<32x512xf32>
    %8 = arith.cmpf ogt, %6, %7 : vector<32x512xf32>
    %cst_6 = arith.constant 0.000000e+00 : f32
    %9 = vector.broadcast %cst_6 : f32 to vector<32x512xf32>
    %10 = arith.minimumf %6, %9 : vector<32x512xf32>
    %11 = math.exp %10 : vector<32x512xf32>
    %cst_7 = arith.constant 1.000000e+00 : f32
    %12 = vector.broadcast %cst_7 : f32 to vector<32x512xf32>
    %13 = arith.subf %11, %12 : vector<32x512xf32>
    %14 = arith.select %8, %6, %13 : vector<32x512xi1>, vector<32x512xf32>
    %15 = arith.truncf %14 : vector<32x512xf32> to vector<32x512xbf16>
    %c32 = arith.constant 32 : index
    %c0_8 = arith.constant 0 : index
    %16 = vector.load %arg3[%c32, %c0_8] : memref<160x128xbf16, #tpu.memory_space<vmem>>, vector<32x32xbf16>
    %c32_9 = arith.constant 32 : index
    %c0_10 = arith.constant 0 : index
    %17 = vector.load %arg4[%c32_9, %c0_10] : memref<160x1xf32, #tpu.memory_space<vmem>>, vector<32x1xf32>
    %cst_11 = arith.constant dense<0.000000e+00> : vector<32x512xf32>
    %18 = tpu.matmul %16, %15, %cst_11 {dimension_numbers = #tpu.dot_dimension_numbers<[1], [0], [0], [1], [0, 0, 1, 1], [], []>} : vector<32x32xbf16>, vector<32x512xbf16>, vector<32x512xf32> -> vector<32x512xf32>
    %19 = vector.broadcast %17 : vector<32x1xf32> to vector<32x512xf32>
    %20 = arith.addf %18, %19 : vector<32x512xf32>
    %cst_12 = arith.constant 0.000000e+00 : f32
    %21 = vector.broadcast %cst_12 : f32 to vector<32x512xf32>
    %22 = arith.cmpf ogt, %20, %21 : vector<32x512xf32>
    %cst_13 = arith.constant 0.000000e+00 : f32
    %23 = vector.broadcast %cst_13 : f32 to vector<32x512xf32>
    %24 = arith.minimumf %20, %23 : vector<32x512xf32>
    %25 = math.exp %24 : vector<32x512xf32>
    %cst_14 = arith.constant 1.000000e+00 : f32
    %26 = vector.broadcast %cst_14 : f32 to vector<32x512xf32>
    %27 = arith.subf %25, %26 : vector<32x512xf32>
    %28 = arith.select %22, %20, %27 : vector<32x512xi1>, vector<32x512xf32>
    %29 = arith.truncf %28 : vector<32x512xf32> to vector<32x512xbf16>
    %c64 = arith.constant 64 : index
    %c0_15 = arith.constant 0 : index
    %30 = vector.load %arg3[%c64, %c0_15] : memref<160x128xbf16, #tpu.memory_space<vmem>>, vector<8x32xbf16>
    %c64_16 = arith.constant 64 : index
    %c0_17 = arith.constant 0 : index
    %31 = vector.load %arg4[%c64_16, %c0_17] : memref<160x1xf32, #tpu.memory_space<vmem>>, vector<8x1xf32>
    %cst_18 = arith.constant dense<0.000000e+00> : vector<8x512xf32>
    %32 = tpu.matmul %30, %29, %cst_18 {dimension_numbers = #tpu.dot_dimension_numbers<[1], [0], [0], [1], [0, 0, 1, 1], [], []>} : vector<8x32xbf16>, vector<32x512xbf16>, vector<8x512xf32> -> vector<8x512xf32>
    %33 = vector.broadcast %31 : vector<8x1xf32> to vector<8x512xf32>
    %34 = arith.addf %32, %33 : vector<8x512xf32>
    %35 = vector.extract_strided_slice %34 {offsets = [0, 0], sizes = [4, 512], strides = [1, 1]} : vector<8x512xf32> to vector<4x512xf32>
    %36 = vector.extract_strided_slice %34 {offsets = [4, 0], sizes = [4, 512], strides = [1, 1]} : vector<8x512xf32> to vector<4x512xf32>
    %37 = math.exp %36 : vector<4x512xf32>
    %c0_19 = arith.constant 0 : index
    %c0_20 = arith.constant 0 : index
    %38 = vector.load %arg5[%c0_19, %c0_20] : memref<24x512xf32, #tpu.memory_space<vmem>>, vector<4x512xf32>
    tpu.vector_store %arg5[%c0_19, %c0_20], %35 {strides = array<i32>} : memref<24x512xf32, #tpu.memory_space<vmem>>, vector<4x512xf32>,
    %c4 = arith.constant 4 : index
    %c0_21 = arith.constant 0 : index
    %39 = vector.load %arg5[%c4, %c0_21] : memref<24x512xf32, #tpu.memory_space<vmem>>, vector<4x512xf32>
    tpu.vector_store %arg5[%c4, %c0_21], %37 {strides = array<i32>} : memref<24x512xf32, #tpu.memory_space<vmem>>, vector<4x512xf32>,
    %c0_22 = arith.constant 0 : index
    %c0_23 = arith.constant 0 : index
    %40 = vector.load %arg2[%c0_22, %c0_23] : memref<4x512xf32, #tpu.memory_space<vmem>>, vector<4x512xf32>
    %41 = arith.mulf %40, %37 : vector<4x512xf32>
    %42 = arith.addf %35, %41 : vector<4x512xf32>
    %43 = arith.truncf %42 : vector<4x512xf32> to vector<4x512xbf16>
    %c80 = arith.constant 80 : index
    %c0_24 = arith.constant 0 : index
    %44 = vector.load %arg3[%c80, %c0_24] : memref<160x128xbf16, #tpu.memory_space<vmem>>, vector<32x4xbf16>
    %c80_25 = arith.constant 80 : index
    %c0_26 = arith.constant 0 : index
    %45 = vector.load %arg4[%c80_25, %c0_26] : memref<160x1xf32, #tpu.memory_space<vmem>>, vector<32x1xf32>
    %cst_27 = arith.constant dense<0.000000e+00> : vector<32x512xf32>
    %46 = tpu.matmul %44, %43, %cst_27 {dimension_numbers = #tpu.dot_dimension_numbers<[1], [0], [0], [1], [0, 0, 1, 1], [], []>} : vector<32x4xbf16>, vector<4x512xbf16>, vector<32x512xf32> -> vector<32x512xf32>
    %47 = vector.broadcast %45 : vector<32x1xf32> to vector<32x512xf32>
    %48 = arith.addf %46, %47 : vector<32x512xf32>
    %cst_28 = arith.constant 0.000000e+00 : f32
    %49 = vector.broadcast %cst_28 : f32 to vector<32x512xf32>
    %50 = arith.cmpf ogt, %48, %49 : vector<32x512xf32>
    %cst_29 = arith.constant 0.000000e+00 : f32
    %51 = vector.broadcast %cst_29 : f32 to vector<32x512xf32>
    %52 = arith.minimumf %48, %51 : vector<32x512xf32>
    %53 = math.exp %52 : vector<32x512xf32>
    %cst_30 = arith.constant 1.000000e+00 : f32
    %54 = vector.broadcast %cst_30 : f32 to vector<32x512xf32>
    %55 = arith.subf %53, %54 : vector<32x512xf32>
    %56 = arith.select %50, %48, %55 : vector<32x512xi1>, vector<32x512xf32>
    %57 = arith.truncf %56 : vector<32x512xf32> to vector<32x512xbf16>
    %c112 = arith.constant 112 : index
    %c0_31 = arith.constant 0 : index
    %58 = vector.load %arg3[%c112, %c0_31] : memref<160x128xbf16, #tpu.memory_space<vmem>>, vector<32x32xbf16>
    %c112_32 = arith.constant 112 : index
    %c0_33 = arith.constant 0 : index
    %59 = vector.load %arg4[%c112_32, %c0_33] : memref<160x1xf32, #tpu.memory_space<vmem>>, vector<32x1xf32>
    %cst_34 = arith.constant dense<0.000000e+00> : vector<32x512xf32>
    %60 = tpu.matmul %58, %57, %cst_34 {dimension_numbers = #tpu.dot_dimension_numbers<[1], [0], [0], [1], [0, 0, 1, 1], [], []>} : vector<32x32xbf16>, vector<32x512xbf16>, vector<32x512xf32> -> vector<32x512xf32>
    %61 = vector.broadcast %59 : vector<32x1xf32> to vector<32x512xf32>
    %62 = arith.addf %60, %61 : vector<32x512xf32>
    %cst_35 = arith.constant 0.000000e+00 : f32
    %63 = vector.broadcast %cst_35 : f32 to vector<32x512xf32>
    %64 = arith.cmpf ogt, %62, %63 : vector<32x512xf32>
    %cst_36 = arith.constant 0.000000e+00 : f32
    %65 = vector.broadcast %cst_36 : f32 to vector<32x512xf32>
    %66 = arith.minimumf %62, %65 : vector<32x512xf32>
    %67 = math.exp %66 : vector<32x512xf32>
    %cst_37 = arith.constant 1.000000e+00 : f32
    %68 = vector.broadcast %cst_37 : f32 to vector<32x512xf32>
    %69 = arith.subf %67, %68 : vector<32x512xf32>
    %70 = arith.select %64, %62, %69 : vector<32x512xi1>, vector<32x512xf32>
    %71 = arith.truncf %70 : vector<32x512xf32> to vector<32x512xbf16>
    %c144 = arith.constant 144 : index
    %c0_38 = arith.constant 0 : index
    %72 = vector.load %arg3[%c144, %c0_38] : memref<160x128xbf16, #tpu.memory_space<vmem>>, vector<16x32xbf16>
    %c144_39 = arith.constant 144 : index
    %c0_40 = arith.constant 0 : index
    %73 = vector.load %arg4[%c144_39, %c0_40] : memref<160x1xf32, #tpu.memory_space<vmem>>, vector<16x1xf32>
    %cst_41 = arith.constant dense<0.000000e+00> : vector<16x512xf32>
    %74 = tpu.matmul %72, %71, %cst_41 {dimension_numbers = #tpu.dot_dimension_numbers<[1], [0], [0], [1], [0, 0, 1, 1], [], []>} : vector<16x32xbf16>, vector<32x512xbf16>, vector<16x512xf32> -> vector<16x512xf32>
    %75 = vector.broadcast %73 : vector<16x1xf32> to vector<16x512xf32>
    %76 = arith.addf %74, %75 : vector<16x512xf32>
    %77 = vector.extract_strided_slice %76 {offsets = [0, 0], sizes = [8, 512], strides = [1, 1]} : vector<16x512xf32> to vector<8x512xf32>
    %c8 = arith.constant 8 : index
    %c0_42 = arith.constant 0 : index
    %78 = vector.load %arg5[%c8, %c0_42] : memref<24x512xf32, #tpu.memory_space<vmem>>, vector<8x512xf32>
    tpu.vector_store %arg5[%c8, %c0_42], %77 {strides = array<i32>} : memref<24x512xf32, #tpu.memory_space<vmem>>, vector<8x512xf32>,
    %79 = vector.extract_strided_slice %76 {offsets = [8, 0], sizes = [8, 512], strides = [1, 1]} : vector<16x512xf32> to vector<8x512xf32>
    %80 = math.exp %79 : vector<8x512xf32>
    %c16 = arith.constant 16 : index
    %c0_43 = arith.constant 0 : index
    %81 = vector.load %arg5[%c16, %c0_43] : memref<24x512xf32, #tpu.memory_space<vmem>>, vector<8x512xf32>
    tpu.vector_store %arg5[%c16, %c0_43], %80 {strides = array<i32>} : memref<24x512xf32, #tpu.memory_space<vmem>>, vector<8x512xf32>,
    return
  }
  func.func @transform_0(%arg0: i32) -> (i32, i32) {
    %c0_i32 = arith.constant 0 : i32
    %c0_i32_0 = arith.constant 0 : i32
    return %c0_i32, %arg0 : i32, i32
  }
  func.func @transform_1(%arg0: i32) -> (i32, i32) {
    %c0_i32 = arith.constant 0 : i32
    %c0_i32_0 = arith.constant 0 : i32
    return %c0_i32, %arg0 : i32, i32
  }
  func.func @transform_2(%arg0: i32) -> (i32, i32) {
    %c0_i32 = arith.constant 0 : i32
    %c0_i32_0 = arith.constant 0 : i32
    %c0_i32_1 = arith.constant 0 : i32
    return %c0_i32, %c0_i32_0 : i32, i32
  }
  func.func @transform_3(%arg0: i32) -> (i32, i32) {
    %c0_i32 = arith.constant 0 : i32
    %c0_i32_0 = arith.constant 0 : i32
    %c0_i32_1 = arith.constant 0 : i32
    return %c0_i32, %c0_i32_0 : i32, i32
  }
  func.func @transform_4(%arg0: i32) -> (i32, i32) {
    %c0_i32 = arith.constant 0 : i32
    %c0_i32_0 = arith.constant 0 : i32
    return %c0_i32, %arg0 : i32, i32
  }
}

</mosaic_0001>

<llo_original>
// kernel: vae_forward.1
$region0: #{vae_forward.1}
  #allocation0 [shape = 'u32[]', space=smem, size = 0x4, offset = 0x4, fixed_abs, tag = 'smem constant byte address 0x4 - core index']
  #allocation1 [shape = 'u32[144,128]{1,0:T(1,128)}', space=vmem, size = 0x12000, scoped, tag = 'internal scratch']
  %s0 = inlined_call_operand.vmem [shape: f32[6,512], index: 0, kind: input, shape index: {}]
  %s1 = inlined_call_operand.vmem [shape: f32[4,512], index: 1, kind: input, shape index: {}]
  %s2 = inlined_call_operand.vmem [shape: bf16[160,128], index: 2, kind: input, shape index: {}]
  %s3 = inlined_call_operand.vmem [shape: f32[160,1], index: 3, kind: input, shape index: {}]
  %s4 = inlined_call_operand.vmem [shape: f32[24,512], index: 4, kind: output, shape index: {}]
  %s5 = sld [smem:[#allocation0]]
  $region26: #{vae_forward.1} parent=0
    _
  %s7 = ssub.s32 1, %s5
  %s8 = scalar_select 0, %s7, %s5
  // Predicated region
  $region2: #{vae_forward.1} parent=0 // pred_check
    _
  $region3: #{vae_forward.1} parent=0 // pred_check_branch
    %10 = sbr.rel (0) target = $region5
  $region4: #{vae_forward.1} parent=0 // pred_region
    _
  $region5: #{vae_forward.1} parent=0 // pred_fallthru
    _
  // Predicated region
  $region6: #{vae_forward.1} parent=0 // pred_check
    _
  $region7: #{vae_forward.1} parent=0 // pred_check_branch
    %12 = sbr.rel (0) target = $region9
  $region8: #{vae_forward.1} parent=0 // pred_region
    _
  $region9: #{vae_forward.1} parent=0 // pred_fallthru
    _
  // Predicated region
  $region10: #{vae_forward.1} parent=0 // pred_check
    _
  $region11: #{vae_forward.1} parent=0 // pred_check_branch
    %14 = sbr.rel (0) target = $region13
  $region12: #{vae_forward.1} parent=0 // pred_region
    _
  $region13: #{vae_forward.1} parent=0 // pred_fallthru
    _
  // Predicated region
  $region14: #{vae_forward.1} parent=0 // pred_check
    _
  $region15: #{vae_forward.1} parent=0 // pred_check_branch
    %16 = sbr.rel (0) target = $region17
  $region16: #{vae_forward.1} parent=0 // pred_region
    _
  $region17: #{vae_forward.1} parent=0 // pred_fallthru
    _
  %v18 = vld [vmem:[%s0] sm:$0x3f]
  %v19 = vld [vmem:[%s0 + $0x8] sm:$0x3f]
  %v20 = vld [vmem:[%s0 + $0x10] sm:$0x3f]
  %v21 = vld [vmem:[%s0 + $0x18] sm:$0x3f]
  %v22 = vpack.c.bf16 %v18, %v18
  %v23 = vpack.c.bf16 %v19, %v19
  %v24 = vpack.c.bf16 %v20, %v20
  %v25 = vpack.c.bf16 %v21, %v21
  %v26 = vld [vmem:[%s2] sm:$0xf]
  %v27 = vld [vmem:[%s2 + $0x4] sm:$0xf]
  %v28 = vld [vmem:[%s2 + $0x8] sm:$0xf]
  %v29 = vld [vmem:[%s2 + $0xc] sm:$0xf]
  %v30 = vld [vmem:[%s3] sm:$0xff]
  %v31 = vld [vmem:[%s3 + $0x8] sm:$0xff]
  %v32 = vld [vmem:[%s3 + $0x10] sm:$0xff]
  %v33 = vld [vmem:[%s3 + $0x18] sm:$0xff]
  %35 = vset.pattern.permute.xlu0 0
  %36 = vperm.xlu0 %35, %v30
  %v37 = vpop.permute.xlu0 %36
  %40 = vset.pattern.permute.xlu0 0
  %41 = vperm.xlu0 %40, %v31
  %v42 = vpop.permute.xlu0 %41
  %45 = vset.pattern.permute.xlu0 0
  %46 = vperm.xlu0 %45, %v32
  %v47 = vpop.permute.xlu0 %46
  %50 = vset.pattern.permute.xlu0 0
  %51 = vperm.xlu0 %50, %v33
  %v52 = vpop.permute.xlu0 %51
  %v58 = vunpack.c.l.b16 %v26
  %v59 = vunpack.c.l.b16 %v27
  %v60 = vunpack.c.l.b16 %v28
  %v61 = vunpack.c.l.b16 %v29
  %v62 = vpack.c.b16 %v59, %v58
  %v63 = vpack.c.b16 %v61, %v60
  %vm64 = vcmask 48128
  %v66 = vsel %vm64, %v62, 0
  %v69 = vsel %vm64, %v63, 0
  %vm71 = vcmask 1042432
  %v73 = vsel %vm71, %v22, 0
  %v76 = vsel %vm71, %v23, 0
  %v79 = vsel %vm71, %v24, 0
  %v82 = vsel %vm71, %v25, 0
  %84 = vmatprep.subr.bf16.mxu0 0
  %85 = vmatpush1.bf16.msra.mxu0 0
  %86 = vmatprep.subr.bf16.mxu0 0
  %87 = vmatpush1.bf16.msra.mxu0 0
  %88 = vmatprep.subr.bf16.mxu0 0
  %89 = vmatpush1.bf16.msra.mxu0 0
  %90 = vmatprep.subr.bf16.mxu0 0
  %91 = vmatpush1.bf16.msra.mxu0 0
  %92 = vmatprep.subr.bf16.mxu0 0
  %93 = vmatpush1.bf16.msra.mxu0 0
  %94 = vmatprep.subr.bf16.mxu0 0
  %95 = vmatpush1.bf16.msra.mxu0 0
  %96 = vmatprep.subr.bf16.mxu0 0
  %97 = vmatpush1.bf16.msra.mxu0 0
  %98 = vmatprep.subr.bf16.mxu0 %v76
  %99 = vmatpush1.bf16.msra.mxu0 %v73
  %100 = vmatprep.subr.bf16.mxu0 0
  %101 = vmatpush2.bf16.msra.mxu0 0
  %102 = vmatprep.subr.bf16.mxu0 0
  %103 = vmatpush2.bf16.msra.mxu0 0
  %104 = vmatprep.subr.bf16.mxu0 0
  %105 = vmatpush2.bf16.msra.mxu0 0
  %106 = vmatprep.subr.bf16.mxu0 0
  %107 = vmatpush2.bf16.msra.mxu0 0
  %108 = vmatprep.subr.bf16.mxu0 0
  %109 = vmatpush2.bf16.msra.mxu0 0
  %110 = vmatprep.subr.bf16.mxu0 0
  %111 = vmatpush2.bf16.msra.mxu0 0
  %112 = vmatprep.subr.bf16.mxu0 0
  %113 = vmatpush2.bf16.msra.mxu0 0
  %114 = vmatprep.subr.bf16.mxu0 0
  %115 = vmatpush2.bf16.msra.mxu0 0
  %116 = vmatprep.mubr.bf16.mxu0 0
  %117 = vmatmul.mubr.bf16.gmra.mxu0 %v66
  %v118 = vpop.f32.mrf.mxu0
  %v119 = vadd.f32 %v37, %v118
  %v120 = vpop.f32.mrf.mxu0
  %v121 = vadd.f32 %v37, %v120
  %v122 = vpop.f32.mrf.mxu0
  %v123 = vadd.f32 %v42, %v122
  %v124 = vpop.f32.mrf.mxu0
  %v125 = vadd.f32 %v42, %v124
  %126 = vmatprep.mubr.bf16.mxu0 0
  %127 = vmatmul.mubr.bf16.gmra.mxu0 %v69
  %v128 = vpop.f32.mrf.mxu0
  %v129 = vadd.f32 %v47, %v128
  %v130 = vpop.f32.mrf.mxu0
  %v131 = vadd.f32 %v47, %v130
  %v132 = vpop.f32.mrf.mxu0
  %v133 = vadd.f32 %v52, %v132
  %v134 = vpop.f32.mrf.mxu0
  %v135 = vadd.f32 %v52, %v134
  %136 = vdwg.mxu0
  %137 = vmatprep.subr.bf16.mxu0 0
  %138 = vmatpush1.bf16.msra.mxu0 0
  %139 = vmatprep.subr.bf16.mxu0 0
  %140 = vmatpush1.bf16.msra.mxu0 0
  %141 = vmatprep.subr.bf16.mxu0 0
  %142 = vmatpush1.bf16.msra.mxu0 0
  %143 = vmatprep.subr.bf16.mxu0 0
  %144 = vmatpush1.bf16.msra.mxu0 0
  %145 = vmatprep.subr.bf16.mxu0 0
  %146 = vmatpush1.bf16.msra.mxu0 0
  %147 = vmatprep.subr.bf16.mxu0 0
  %148 = vmatpush1.bf16.msra.mxu0 0
  %149 = vmatprep.subr.bf16.mxu0 0
  %150 = vmatpush1.bf16.msra.mxu0 0
  %151 = vmatprep.subr.bf16.mxu0 %v82
  %152 = vmatpush1.bf16.msra.mxu0 %v79
  %153 = vmatprep.subr.bf16.mxu0 0
  %154 = vmatpush2.bf16.msra.mxu0 0
  %155 = vmatprep.subr.bf16.mxu0 0
  %156 = vmatpush2.bf16.msra.mxu0 0
  %157 = vmatprep.subr.bf16.mxu0 0
  %158 = vmatpush2.bf16.msra.mxu0 0
  %159 = vmatprep.subr.bf16.mxu0 0
  %160 = vmatpush2.bf16.msra.mxu0 0
  %161 = vmatprep.subr.bf16.mxu0 0
  %162 = vmatpush2.bf16.msra.mxu0 0
  %163 = vmatprep.subr.bf16.mxu0 0
  %164 = vmatpush2.bf16.msra.mxu0 0
  %165 = vmatprep.subr.bf16.mxu0 0
  %166 = vmatpush2.bf16.msra.mxu0 0
  %167 = vmatprep.subr.bf16.mxu0 0
  %168 = vmatpush2.bf16.msra.mxu0 0
  %169 = vmatprep.mubr.bf16.mxu0 0
  %170 = vmatmul.mubr.bf16.gmra.mxu0 %v66
  %v171 = vpop.f32.mrf.mxu0
  %v172 = vadd.f32 %v37, %v171
  %v173 = vpop.f32.mrf.mxu0
  %v174 = vadd.f32 %v37, %v173
  %v175 = vpop.f32.mrf.mxu0
  %v176 = vadd.f32 %v42, %v175
  %v177 = vpop.f32.mrf.mxu0
  %v178 = vadd.f32 %v42, %v177
  %179 = vmatprep.mubr.bf16.mxu0 0
  %180 = vmatmul.mubr.bf16.gmra.mxu0 %v69
  %v181 = vpop.f32.mrf.mxu0
  %v182 = vadd.f32 %v47, %v181
  %v183 = vpop.f32.mrf.mxu0
  %v184 = vadd.f32 %v47, %v183
  %v185 = vpop.f32.mrf.mxu0
  %v186 = vadd.f32 %v52, %v185
  %v187 = vpop.f32.mrf.mxu0
  %v188 = vadd.f32 %v52, %v187
  %189 = vdwg.mxu0
  %vm190 = vcmp.gt.f32.partialorder %v119, 0.0
  %vm191 = vcmp.gt.f32.partialorder %v121, 0.0
  %vm192 = vcmp.gt.f32.partialorder %v172, 0.0
  %vm193 = vcmp.gt.f32.partialorder %v174, 0.0
  %vm194 = vcmp.gt.f32.partialorder %v123, 0.0
  %vm195 = vcmp.gt.f32.partialorder %v125, 0.0
  %vm196 = vcmp.gt.f32.partialorder %v176, 0.0
  %vm197 = vcmp.gt.f32.partialorder %v178, 0.0
  %vm198 = vcmp.gt.f32.partialorder %v129, 0.0
  %vm199 = vcmp.gt.f32.partialorder %v131, 0.0
  %vm200 = vcmp.gt.f32.partialorder %v182, 0.0
  %vm201 = vcmp.gt.f32.partialorder %v184, 0.0
  %vm202 = vcmp.gt.f32.partialorder %v133, 0.0
  %vm203 = vcmp.gt.f32.partialorder %v135, 0.0
  %vm204 = vcmp.gt.f32.partialorder %v186, 0.0
  %vm205 = vcmp.gt.f32.partialorder %v188, 0.0
  %v206 = vmin.f32 %v119, 0.0
  %v207 = vmin.f32 %v121, 0.0
  %v208 = vmin.f32 %v172, 0.0
  %v209 = vmin.f32 %v174, 0.0
  %v210 = vmin.f32 %v123, 0.0
  %v211 = vmin.f32 %v125, 0.0
  %v212 = vmin.f32 %v176, 0.0
  %v213 = vmin.f32 %v178, 0.0
  %v214 = vmin.f32 %v129, 0.0
  %v215 = vmin.f32 %v131, 0.0
  %v216 = vmin.f32 %v182, 0.0
  %v217 = vmin.f32 %v184, 0.0
  %v218 = vmin.f32 %v133, 0.0
  %v219 = vmin.f32 %v135, 0.0
  %v220 = vmin.f32 %v186, 0.0
  %v221 = vmin.f32 %v188, 0.0
  %v222 = vmul.f32 %v206, 1.442695
  %v223 = vpow.pop %v222
  %v224 = vmul.f32 %v207, 1.442695
  %v225 = vpow.pop %v224
  %v226 = vmul.f32 %v208, 1.442695
  %v227 = vpow.pop %v226
  %v228 = vmul.f32 %v209, 1.442695
  %v229 = vpow.pop %v228
  %v230 = vmul.f32 %v210, 1.442695
  %v231 = vpow.pop %v230
  %v232 = vmul.f32 %v211, 1.442695
  %v233 = vpow.pop %v232
  %v234 = vmul.f32 %v212, 1.442695
  %v235 = vpow.pop %v234
  %v236 = vmul.f32 %v213, 1.442695
  %v237 = vpow.pop %v236
  %v238 = vmul.f32 %v214, 1.442695
  %v239 = vpow.pop %v238
  %v240 = vmul.f32 %v215, 1.442695
  %v241 = vpow.pop %v240
  %v242 = vmul.f32 %v216, 1.442695
  %v243 = vpow.pop %v242
  %v244 = vmul.f32 %v217, 1.442695
  %v245 = vpow.pop %v244
  %v246 = vmul.f32 %v218, 1.442695
  %v247 = vpow.pop %v246
  %v248 = vmul.f32 %v219, 1.442695
  %v249 = vpow.pop %v248
  %v250 = vmul.f32 %v220, 1.442695
  %v251 = vpow.pop %v250
  %v252 = vmul.f32 %v221, 1.442695
  %v253 = vpow.pop %v252
  %v254 = vsub.f32 %v223, 1.0
  %v255 = vsub.f32 %v225, 1.0
  %v256 = vsub.f32 %v227, 1.0
  %v257 = vsub.f32 %v229, 1.0
  %v258 = vsub.f32 %v231, 1.0
  %v259 = vsub.f32 %v233, 1.0
  %v260 = vsub.f32 %v235, 1.0
  %v261 = vsub.f32 %v237, 1.0
  %v262 = vsub.f32 %v239, 1.0
  %v263 = vsub.f32 %v241, 1.0
  %v264 = vsub.f32 %v243, 1.0
  %v265 = vsub.f32 %v245, 1.0
  %v266 = vsub.f32 %v247, 1.0
  %v267 = vsub.f32 %v249, 1.0
  %v268 = vsub.f32 %v251, 1.0
  %v269 = vsub.f32 %v253, 1.0
  %v270 = vsel %vm190, %v119, %v254
  %v271 = vsel %vm191, %v121, %v255
  %v272 = vsel %vm192, %v172, %v256
  %v273 = vsel %vm193, %v174, %v257
  %v274 = vsel %vm194, %v123, %v258
  %v275 = vsel %vm195, %v125, %v259
  %v276 = vsel %vm196, %v176, %v260
  %v277 = vsel %vm197, %v178, %v261
  %v278 = vsel %vm198, %v129, %v262
  %v279 = vsel %vm199, %v131, %v263
  %v280 = vsel %vm200, %v182, %v264
  %v281 = vsel %vm201, %v184, %v265
  %v282 = vsel %vm202, %v133, %v266
  %v283 = vsel %vm203, %v135, %v267
  %v284 = vsel %vm204, %v186, %v268
  %v285 = vsel %vm205, %v188, %v269
  %v286 = vpack.c.bf16 %v274, %v270
  %v287 = vpack.c.bf16 %v275, %v271
  %v288 = vpack.c.bf16 %v276, %v272
  %v289 = vpack.c.bf16 %v277, %v273
  %v290 = vpack.c.bf16 %v282, %v278
  %v291 = vpack.c.bf16 %v283, %v279
  %v292 = vpack.c.bf16 %v284, %v280
  %v293 = vpack.c.bf16 %v285, %v281
  %v294 = vld [vmem:[%s2 + $0x10] sm:$0xf]
  %v295 = vld [vmem:[%s2 + $0x14] sm:$0xf]
  %v296 = vld [vmem:[%s2 + $0x18] sm:$0xf]
  %v297 = vld [vmem:[%s2 + $0x1c] sm:$0xf]
  %v298 = vld [vmem:[%s3 + $0x20] sm:$0xff]
  %v299 = vld [vmem:[%s3 + $0x28] sm:$0xff]
  %v300 = vld [vmem:[%s3 + $0x30] sm:$0xff]
  %v301 = vld [vmem:[%s3 + $0x38] sm:$0xff]
  %303 = vset.pattern.permute.xlu0 0
  %304 = vperm.xlu0 %303, %v298
  %v305 = vpop.permute.xlu0 %304
  %308 = vset.pattern.permute.xlu0 0
  %309 = vperm.xlu0 %308, %v299
  %v310 = vpop.permute.xlu0 %309
  %313 = vset.pattern.permute.xlu0 0
  %314 = vperm.xlu0 %313, %v300
  %v315 = vpop.permute.xlu0 %314
  %318 = vset.pattern.permute.xlu0 0
  %319 = vperm.xlu0 %318, %v301
  %v320 = vpop.permute.xlu0 %319
  %v326 = vunpack.c.l.b16 %v294
  %v327 = vunpack.c.l.b16 %v295
  %v328 = vunpack.c.l.b16 %v296
  %v329 = vunpack.c.l.b16 %v297
  %v330 = vpack.c.b16 %v327, %v326
  %v331 = vpack.c.b16 %v329, %v328
  %vm332 = vcmask 261120
  %v334 = vsel %vm332, %v330, 0
  %v337 = vsel %vm332, %v331, 0
  %339 = vmatprep.subr.bf16.mxu0 0
  %340 = vmatpush1.bf16.msra.mxu0 0
  %341 = vmatprep.subr.bf16.mxu0 0
  %342 = vmatpush1.bf16.msra.mxu0 0
  %343 = vmatprep.subr.bf16.mxu0 0
  %344 = vmatpush1.bf16.msra.mxu0 0
  %345 = vmatprep.subr.bf16.mxu0 0
  %346 = vmatpush1.bf16.msra.mxu0 0
  %347 = vmatprep.subr.bf16.mxu0 0
  %348 = vmatpush1.bf16.msra.mxu0 0
  %349 = vmatprep.subr.bf16.mxu0 0
  %350 = vmatpush1.bf16.msra.mxu0 0
  %351 = vmatprep.subr.bf16.mxu0 %v291
  %352 = vmatpush1.bf16.msra.mxu0 %v290
  %353 = vmatprep.subr.bf16.mxu0 %v287
  %354 = vmatpush1.bf16.msra.mxu0 %v286
  %355 = vmatprep.subr.bf16.mxu0 0
  %356 = vmatpush2.bf16.msra.mxu0 0
  %357 = vmatprep.subr.bf16.mxu0 0
  %358 = vmatpush2.bf16.msra.mxu0 0
  %359 = vmatprep.subr.bf16.mxu0 0
  %360 = vmatpush2.bf16.msra.mxu0 0
  %361 = vmatprep.subr.bf16.mxu0 0
  %362 = vmatpush2.bf16.msra.mxu0 0
  %363 = vmatprep.subr.bf16.mxu0 0
  %364 = vmatpush2.bf16.msra.mxu0 0
  %365 = vmatprep.subr.bf16.mxu0 0
  %366 = vmatpush2.bf16.msra.mxu0 0
  %367 = vmatprep.subr.bf16.mxu0 0
  %368 = vmatpush2.bf16.msra.mxu0 0
  %369 = vmatprep.subr.bf16.mxu0 0
  %370 = vmatpush2.bf16.msra.mxu0 0
  %371 = vmatprep.mubr.bf16.mxu0 0
  %372 = vmatmul.mubr.bf16.gmra.mxu0 %v334
  %v373 = vpop.f32.mrf.mxu0
  %v374 = vadd.f32 %v305, %v373
  %v375 = vpop.f32.mrf.mxu0
  %v376 = vadd.f32 %v305, %v375
  %v377 = vpop.f32.mrf.mxu0
  %v378 = vadd.f32 %v310, %v377
  %v379 = vpop.f32.mrf.mxu0
  %v380 = vadd.f32 %v310, %v379
  %381 = vmatprep.mubr.bf16.mxu0 0
  %382 = vmatmul.mubr.bf16.gmra.mxu0 %v337
  %v383 = vpop.f32.mrf.mxu0
  %v384 = vadd.f32 %v315, %v383
  %v385 = vpop.f32.mrf.mxu0
  %v386 = vadd.f32 %v315, %v385
  %v387 = vpop.f32.mrf.mxu0
  %v388 = vadd.f32 %v320, %v387
  %v389 = vpop.f32.mrf.mxu0
  %v390 = vadd.f32 %v320, %v389
  %391 = vdwg.mxu0
  %392 = vmatprep.subr.bf16.mxu0 0
  %393 = vmatpush1.bf16.msra.mxu0 0
  %394 = vmatprep.subr.bf16.mxu0 0
  %395 = vmatpush1.bf16.msra.mxu0 0
  %396 = vmatprep.subr.bf16.mxu0 0
  %397 = vmatpush1.bf16.msra.mxu0 0
  %398 = vmatprep.subr.bf16.mxu0 0
  %399 = vmatpush1.bf16.msra.mxu0 0
  %400 = vmatprep.subr.bf16.mxu0 0
  %401 = vmatpush1.bf16.msra.mxu0 0
  %402 = vmatprep.subr.bf16.mxu0 0
  %403 = vmatpush1.bf16.msra.mxu0 0
  %404 = vmatprep.subr.bf16.mxu0 %v293
  %405 = vmatpush1.bf16.msra.mxu0 %v292
  %406 = vmatprep.subr.bf16.mxu0 %v289
  %407 = vmatpush1.bf16.msra.mxu0 %v288
  %408 = vmatprep.subr.bf16.mxu0 0
  %409 = vmatpush2.bf16.msra.mxu0 0
  %410 = vmatprep.subr.bf16.mxu0 0
  %411 = vmatpush2.bf16.msra.mxu0 0
  %412 = vmatprep.subr.bf16.mxu0 0
  %413 = vmatpush2.bf16.msra.mxu0 0
  %414 = vmatprep.subr.bf16.mxu0 0
  %415 = vmatpush2.bf16.msra.mxu0 0
  %416 = vmatprep.subr.bf16.mxu0 0
  %417 = vmatpush2.bf16.msra.mxu0 0
  %418 = vmatprep.subr.bf16.mxu0 0
  %419 = vmatpush2.bf16.msra.mxu0 0
  %420 = vmatprep.subr.bf16.mxu0 0
  %421 = vmatpush2.bf16.msra.mxu0 0
  %422 = vmatprep.subr.bf16.mxu0 0
  %423 = vmatpush2.bf16.msra.mxu0 0
  %424 = vmatprep.mubr.bf16.mxu0 0
  %425 = vmatmul.mubr.bf16.gmra.mxu0 %v334
  %v426 = vpop.f32.mrf.mxu0
  %v427 = vadd.f32 %v305, %v426
  %v428 = vpop.f32.mrf.mxu0
  %v429 = vadd.f32 %v305, %v428
  %v430 = vpop.f32.mrf.mxu0
  %v431 = vadd.f32 %v310, %v430
  %v432 = vpop.f32.mrf.mxu0
  %v433 = vadd.f32 %v310, %v432
  %434 = vmatprep.mubr.bf16.mxu0 0
  %435 = vmatmul.mubr.bf16.gmra.mxu0 %v337
  %v436 = vpop.f32.mrf.mxu0
  %v437 = vadd.f32 %v315, %v436
  %v438 = vpop.f32.mrf.mxu0
  %v439 = vadd.f32 %v315, %v438
  %v440 = vpop.f32.mrf.mxu0
  %v441 = vadd.f32 %v320, %v440
  %v442 = vpop.f32.mrf.mxu0
  %v443 = vadd.f32 %v320, %v442
  %444 = vdwg.mxu0
  %vm445 = vcmp.gt.f32.partialorder %v374, 0.0
  %vm446 = vcmp.gt.f32.partialorder %v376, 0.0
  %vm447 = vcmp.gt.f32.partialorder %v427, 0.0
  %vm448 = vcmp.gt.f32.partialorder %v429, 0.0
  %vm449 = vcmp.gt.f32.partialorder %v378, 0.0
  %vm450 = vcmp.gt.f32.partialorder %v380, 0.0
  %vm451 = vcmp.gt.f32.partialorder %v431, 0.0
  %vm452 = vcmp.gt.f32.partialorder %v433, 0.0
  %vm453 = vcmp.gt.f32.partialorder %v384, 0.0
  %vm454 = vcmp.gt.f32.partialorder %v386, 0.0
  %vm455 = vcmp.gt.f32.partialorder %v437, 0.0
  %vm456 = vcmp.gt.f32.partialorder %v439, 0.0
  %vm457 = vcmp.gt.f32.partialorder %v388, 0.0
  %vm458 = vcmp.gt.f32.partialorder %v390, 0.0
  %vm459 = vcmp.gt.f32.partialorder %v441, 0.0
  %vm460 = vcmp.gt.f32.partialorder %v443, 0.0
  %v461 = vmin.f32 %v374, 0.0
  %v462 = vmin.f32 %v376, 0.0
  %v463 = vmin.f32 %v427, 0.0
  %v464 = vmin.f32 %v429, 0.0
  %v465 = vmin.f32 %v378, 0.0
  %v466 = vmin.f32 %v380, 0.0
  %v467 = vmin.f32 %v431, 0.0
  %v468 = vmin.f32 %v433, 0.0
  %v469 = vmin.f32 %v384, 0.0
  %v470 = vmin.f32 %v386, 0.0
  %v471 = vmin.f32 %v437, 0.0
  %v472 = vmin.f32 %v439, 0.0
  %v473 = vmin.f32 %v388, 0.0
  %v474 = vmin.f32 %v390, 0.0
  %v475 = vmin.f32 %v441, 0.0
  %v476 = vmin.f32 %v443, 0.0
  %v477 = vmul.f32 %v461, 1.442695
  %v478 = vpow.pop %v477
  %v479 = vmul.f32 %v462, 1.442695
  %v480 = vpow.pop %v479
  %v481 = vmul.f32 %v463, 1.442695
  %v482 = vpow.pop %v481
  %v483 = vmul.f32 %v464, 1.442695
  %v484 = vpow.pop %v483
  %v485 = vmul.f32 %v465, 1.442695
  %v486 = vpow.pop %v485
  %v487 = vmul.f32 %v466, 1.442695
  %v488 = vpow.pop %v487
  %v489 = vmul.f32 %v467, 1.442695
  %v490 = vpow.pop %v489
  %v491 = vmul.f32 %v468, 1.442695
  %v492 = vpow.pop %v491
  %v493 = vmul.f32 %v469, 1.442695
  %v494 = vpow.pop %v493
  %v495 = vmul.f32 %v470, 1.442695
  %v496 = vpow.pop %v495
  %v497 = vmul.f32 %v471, 1.442695
  %v498 = vpow.pop %v497
  %v499 = vmul.f32 %v472, 1.442695
  %v500 = vpow.pop %v499
  %v501 = vmul.f32 %v473, 1.442695
  %v502 = vpow.pop %v501
  %v503 = vmul.f32 %v474, 1.442695
  %v504 = vpow.pop %v503
  %v505 = vmul.f32 %v475, 1.442695
  %v506 = vpow.pop %v505
  %v507 = vmul.f32 %v476, 1.442695
  %v508 = vpow.pop %v507
  %v509 = vsub.f32 %v478, 1.0
  %v510 = vsub.f32 %v480, 1.0
  %v511 = vsub.f32 %v482, 1.0
  %v512 = vsub.f32 %v484, 1.0
  %v513 = vsub.f32 %v486, 1.0
  %v514 = vsub.f32 %v488, 1.0
  %v515 = vsub.f32 %v490, 1.0
  %v516 = vsub.f32 %v492, 1.0
  %v517 = vsub.f32 %v494, 1.0
  %v518 = vsub.f32 %v496, 1.0
  %v519 = vsub.f32 %v498, 1.0
  %v520 = vsub.f32 %v500, 1.0
  %v521 = vsub.f32 %v502, 1.0
  %v522 = vsub.f32 %v504, 1.0
  %v523 = vsub.f32 %v506, 1.0
  %v524 = vsub.f32 %v508, 1.0
  %v525 = vsel %vm445, %v374, %v509
  %v526 = vsel %vm446, %v376, %v510
  %v527 = vsel %vm447, %v427, %v511
  %v528 = vsel %vm448, %v429, %v512
  %v529 = vsel %vm449, %v378, %v513
  %v530 = vsel %vm450, %v380, %v514
  %v531 = vsel %vm451, %v431, %v515
  %v532 = vsel %vm452, %v433, %v516
  %v533 = vsel %vm453, %v384, %v517
  %v534 = vsel %vm454, %v386, %v518
  %v535 = vsel %vm455, %v437, %v519
  %v536 = vsel %vm456, %v439, %v520
  %v537 = vsel %vm457, %v388, %v521
  %v538 = vsel %vm458, %v390, %v522
  %v539 = vsel %vm459, %v441, %v523
  %v540 = vsel %vm460, %v443, %v524
  %v541 = vpack.c.bf16 %v529, %v525
  %v542 = vpack.c.bf16 %v530, %v526
  %v543 = vpack.c.bf16 %v531, %v527
  %v544 = vpack.c.bf16 %v532, %v528
  %v545 = vpack.c.bf16 %v537, %v533
  %v546 = vpack.c.bf16 %v538, %v534
  %v547 = vpack.c.bf16 %v539, %v535
  %v548 = vpack.c.bf16 %v540, %v536
  %v549 = vld [vmem:[%s2 + $0x20] sm:$0xf]
  %v550 = vld [vmem:[%s3 + $0x40] sm:$0xff]
  %552 = vset.pattern.permute.xlu0 0
  %553 = vperm.xlu0 %552, %v550
  %v554 = vpop.permute.xlu0 %553
  %v557 = vsel %vm332, %v549, 0
  %559 = vmatprep.subr.bf16.mxu0 0
  %560 = vmatpush1.bf16.msra.mxu0 0
  %561 = vmatprep.subr.bf16.mxu0 0
  %562 = vmatpush1.bf16.msra.mxu0 0
  %563 = vmatprep.subr.bf16.mxu0 0
  %564 = vmatpush1.bf16.msra.mxu0 0
  %565 = vmatprep.subr.bf16.mxu0 0
  %566 = vmatpush1.bf16.msra.mxu0 0
  %567 = vmatprep.subr.bf16.mxu0 0
  %568 = vmatpush1.bf16.msra.mxu0 0
  %569 = vmatprep.subr.bf16.mxu0 0
  %570 = vmatpush1.bf16.msra.mxu0 0
  %571 = vmatprep.subr.bf16.mxu0 %v546
  %572 = vmatpush1.bf16.msra.mxu0 %v545
  %573 = vmatprep.subr.bf16.mxu0 %v542
  %574 = vmatpush1.bf16.msra.mxu0 %v541
  %575 = vmatprep.subr.bf16.mxu0 0
  %576 = vmatpush2.bf16.msra.mxu0 0
  %577 = vmatprep.subr.bf16.mxu0 0
  %578 = vmatpush2.bf16.msra.mxu0 0
  %579 = vmatprep.subr.bf16.mxu0 0
  %580 = vmatpush2.bf16.msra.mxu0 0
  %581 = vmatprep.subr.bf16.mxu0 0
  %582 = vmatpush2.bf16.msra.mxu0 0
  %583 = vmatprep.subr.bf16.mxu0 0
  %584 = vmatpush2.bf16.msra.mxu0 0
  %585 = vmatprep.subr.bf16.mxu0 0
  %586 = vmatpush2.bf16.msra.mxu0 0
  %587 = vmatprep.subr.bf16.mxu0 0
  %588 = vmatpush2.bf16.msra.mxu0 0
  %589 = vmatprep.subr.bf16.mxu0 0
  %590 = vmatpush2.bf16.msra.mxu0 0
  %591 = vmatprep.mubr.bf16.mxu0 0
  %592 = vmatmul.mubr.bf16.gmra.mxu0 %v557
  %v593 = vpop.f32.mrf.mxu0
  %v594 = vadd.f32 %v554, %v593
  %v595 = vpop.f32.mrf.mxu0
  %v596 = vadd.f32 %v554, %v595
  %v597 = vpop.f32.mrf.mxu0
  %v598 = vpop.f32.mrf.mxu0
  %599 = vdwg.mxu0
  %600 = vmatprep.subr.bf16.mxu0 0
  %601 = vmatpush1.bf16.msra.mxu0 0
  %602 = vmatprep.subr.bf16.mxu0 0
  %603 = vmatpush1.bf16.msra.mxu0 0
  %604 = vmatprep.subr.bf16.mxu0 0
  %605 = vmatpush1.bf16.msra.mxu0 0
  %606 = vmatprep.subr.bf16.mxu0 0
  %607 = vmatpush1.bf16.msra.mxu0 0
  %608 = vmatprep.subr.bf16.mxu0 0
  %609 = vmatpush1.bf16.msra.mxu0 0
  %610 = vmatprep.subr.bf16.mxu0 0
  %611 = vmatpush1.bf16.msra.mxu0 0
  %612 = vmatprep.subr.bf16.mxu0 %v548
  %613 = vmatpush1.bf16.msra.mxu0 %v547
  %614 = vmatprep.subr.bf16.mxu0 %v544
  %615 = vmatpush1.bf16.msra.mxu0 %v543
  %616 = vmatprep.subr.bf16.mxu0 0
  %617 = vmatpush2.bf16.msra.mxu0 0
  %618 = vmatprep.subr.bf16.mxu0 0
  %619 = vmatpush2.bf16.msra.mxu0 0
  %620 = vmatprep.subr.bf16.mxu0 0
  %621 = vmatpush2.bf16.msra.mxu0 0
  %622 = vmatprep.subr.bf16.mxu0 0
  %623 = vmatpush2.bf16.msra.mxu0 0
  %624 = vmatprep.subr.bf16.mxu0 0
  %625 = vmatpush2.bf16.msra.mxu0 0
  %626 = vmatprep.subr.bf16.mxu0 0
  %627 = vmatpush2.bf16.msra.mxu0 0
  %628 = vmatprep.subr.bf16.mxu0 0
  %629 = vmatpush2.bf16.msra.mxu0 0
  %630 = vmatprep.subr.bf16.mxu0 0
  %631 = vmatpush2.bf16.msra.mxu0 0
  %632 = vmatprep.mubr.bf16.mxu0 0
  %633 = vmatmul.mubr.bf16.gmra.mxu0 %v557
  %v634 = vpop.f32.mrf.mxu0
  %v635 = vadd.f32 %v554, %v634
  %v636 = vpop.f32.mrf.mxu0
  %v637 = vadd.f32 %v554, %v636
  %v638 = vpop.f32.mrf.mxu0
  %v639 = vpop.f32.mrf.mxu0
  %640 = vdwg.mxu0
  %v641 = vmul.f32 %v594, 1.442695
  %v642 = vpow.pop %v641
  %v643 = vmul.f32 %v596, 1.442695
  %v644 = vpow.pop %v643
  %v645 = vmul.f32 %v635, 1.442695
  %v646 = vpow.pop %v645
  %v647 = vmul.f32 %v637, 1.442695
  %v648 = vpow.pop %v647
  %649 = vst [vmem:[%s4] sm:$0xf] %v594
  %650 = vst [vmem:[%s4 + $0x8] sm:$0xf] %v596
  %651 = vst [vmem:[%s4 + $0x10] sm:$0xf] %v635
  %652 = vst [vmem:[%s4 + $0x18] sm:$0xf] %v637
  %653 = vst [vmem:[%s4] sm:$0xf0] %v642
  %654 = vst [vmem:[%s4 + $0x8] sm:$0xf0] %v644
  %655 = vst [vmem:[%s4 + $0x10] sm:$0xf0] %v646
  %656 = vst [vmem:[%s4 + $0x18] sm:$0xf0] %v648
  %v657 = vld [vmem:[%s1] sm:$0xff]
  %v658 = vld [vmem:[%s1 + $0x8] sm:$0xff]
  %v663 = vcombine.high %v642, %v644
  %v664 = vcombine.high %v646, %v648
  %v667 = vmul.f32 %v657, %v663
  %v668 = vmul.f32 %v658, %v664
  %v671 = vcombine.high %v667, %v667
  %v672 = vcombine.high %v668, %v668
  %v675 = vadd.f32 %v594, %v667
  %v676 = vadd.f32 %v596, %v671
  %v677 = vadd.f32 %v635, %v668
  %v678 = vadd.f32 %v637, %v672
  %v679 = vpack.c.bf16 %v675, %v675
  %v680 = vpack.c.bf16 %v676, %v676
  %v681 = vpack.c.bf16 %v677, %v677
  %v682 = vpack.c.bf16 %v678, %v678
  %v683 = vld [vmem:[%s2 + $0x28] sm:$0xf]
  %v684 = vld [vmem:[%s2 + $0x2c] sm:$0xf]
  %v685 = vld [vmem:[%s2 + $0x30] sm:$0xf]
  %v686 = vld [vmem:[%s2 + $0x34] sm:$0xf]
  %v687 = vld [vmem:[%s3 + $0x50] sm:$0xff]
  %v688 = vld [vmem:[%s3 + $0x58] sm:$0xff]
  %v689 = vld [vmem:[%s3 + $0x60] sm:$0xff]
  %v690 = vld [vmem:[%s3 + $0x68] sm:$0xff]
  %692 = vset.pattern.permute.xlu0 0
  %693 = vperm.xlu0 %692, %v687
  %v694 = vpop.permute.xlu0 %693
  %697 = vset.pattern.permute.xlu0 0
  %698 = vperm.xlu0 %697, %v688
  %v699 = vpop.permute.xlu0 %698
  %702 = vset.pattern.permute.xlu0 0
  %703 = vperm.xlu0 %702, %v689
  %v704 = vpop.permute.xlu0 %703
  %707 = vset.pattern.permute.xlu0 0
  %708 = vperm.xlu0 %707, %v690
  %v709 = vpop.permute.xlu0 %708
  %v715 = vunpack.c.l.b16 %v683
  %v716 = vunpack.c.l.b16 %v684
  %v717 = vunpack.c.l.b16 %v685
  %v718 = vunpack.c.l.b16 %v686
  %v719 = vpack.c.b16 %v716, %v715
  %v720 = vpack.c.b16 %v718, %v717
  %vm721 = vcmask 31744
  %v723 = vsel %vm721, %v719, 0
  %v726 = vsel %vm721, %v720, 0
  %vm728 = vcmask 1041408
  %v730 = vsel %vm728, %v679, 0
  %v733 = vsel %vm728, %v680, 0
  %v736 = vsel %vm728, %v681, 0
  %v739 = vsel %vm728, %v682, 0
  %741 = vmatprep.subr.bf16.mxu0 0
  %742 = vmatpush1.bf16.msra.mxu0 0
  %743 = vmatprep.subr.bf16.mxu0 0
  %744 = vmatpush1.bf16.msra.mxu0 0
  %745 = vmatprep.subr.bf16.mxu0 0
  %746 = vmatpush1.bf16.msra.mxu0 0
  %747 = vmatprep.subr.bf16.mxu0 0
  %748 = vmatpush1.bf16.msra.mxu0 0
  %749 = vmatprep.subr.bf16.mxu0 0
  %750 = vmatpush1.bf16.msra.mxu0 0
  %751 = vmatprep.subr.bf16.mxu0 0
  %752 = vmatpush1.bf16.msra.mxu0 0
  %753 = vmatprep.subr.bf16.mxu0 0
  %754 = vmatpush1.bf16.msra.mxu0 0
  %755 = vmatprep.subr.bf16.mxu0 %v733
  %756 = vmatpush1.bf16.msra.mxu0 %v730
  %757 = vmatprep.subr.bf16.mxu0 0
  %758 = vmatpush2.bf16.msra.mxu0 0
  %759 = vmatprep.subr.bf16.mxu0 0
  %760 = vmatpush2.bf16.msra.mxu0 0
  %761 = vmatprep.subr.bf16.mxu0 0
  %762 = vmatpush2.bf16.msra.mxu0 0
  %763 = vmatprep.subr.bf16.mxu0 0
  %764 = vmatpush2.bf16.msra.mxu0 0
  %765 = vmatprep.subr.bf16.mxu0 0
  %766 = vmatpush2.bf16.msra.mxu0 0
  %767 = vmatprep.subr.bf16.mxu0 0
  %768 = vmatpush2.bf16.msra.mxu0 0
  %769 = vmatprep.subr.bf16.mxu0 0
  %770 = vmatpush2.bf16.msra.mxu0 0
  %771 = vmatprep.subr.bf16.mxu0 0
  %772 = vmatpush2.bf16.msra.mxu0 0
  %773 = vmatprep.mubr.bf16.mxu0 0
  %774 = vmatmul.mubr.bf16.gmra.mxu0 %v723
  %v775 = vpop.f32.mrf.mxu0
  %v776 = vadd.f32 %v694, %v775
  %v777 = vpop.f32.mrf.mxu0
  %v778 = vadd.f32 %v694, %v777
  %v779 = vpop.f32.mrf.mxu0
  %v780 = vadd.f32 %v699, %v779
  %v781 = vpop.f32.mrf.mxu0
  %v782 = vadd.f32 %v699, %v781
  %783 = vmatprep.mubr.bf16.mxu0 0
  %784 = vmatmul.mubr.bf16.gmra.mxu0 %v726
  %v785 = vpop.f32.mrf.mxu0
  %v786 = vadd.f32 %v704, %v785
  %v787 = vpop.f32.mrf.mxu0
  %v788 = vadd.f32 %v704, %v787
  %v789 = vpop.f32.mrf.mxu0
  %v790 = vadd.f32 %v709, %v789
  %v791 = vpop.f32.mrf.mxu0
  %v792 = vadd.f32 %v709, %v791
  %793 = vdwg.mxu0
  %794 = vmatprep.subr.bf16.mxu0 0
  %795 = vmatpush1.bf16.msra.mxu0 0
  %796 = vmatprep.subr.bf16.mxu0 0
  %797 = vmatpush1.bf16.msra.mxu0 0
  %798 = vmatprep.subr.bf16.mxu0 0
  %799 = vmatpush1.bf16.msra.mxu0 0
  %800 = vmatprep.subr.bf16.mxu0 0
  %801 = vmatpush1.bf16.msra.mxu0 0
  %802 = vmatprep.subr.bf16.mxu0 0
  %803 = vmatpush1.bf16.msra.mxu0 0
  %804 = vmatprep.subr.bf16.mxu0 0
  %805 = vmatpush1.bf16.msra.mxu0 0
  %806 = vmatprep.subr.bf16.mxu0 0
  %807 = vmatpush1.bf16.msra.mxu0 0
  %808 = vmatprep.subr.bf16.mxu0 %v739
  %809 = vmatpush1.bf16.msra.mxu0 %v736
  %810 = vmatprep.subr.bf16.mxu0 0
  %811 = vmatpush2.bf16.msra.mxu0 0
  %812 = vmatprep.subr.bf16.mxu0 0
  %813 = vmatpush2.bf16.msra.mxu0 0
  %814 = vmatprep.subr.bf16.mxu0 0
  %815 = vmatpush2.bf16.msra.mxu0 0
  %816 = vmatprep.subr.bf16.mxu0 0
  %817 = vmatpush2.bf16.msra.mxu0 0
  %818 = vmatprep.subr.bf16.mxu0 0
  %819 = vmatpush2.bf16.msra.mxu0 0
  %820 = vmatprep.subr.bf16.mxu0 0
  %821 = vmatpush2.bf16.msra.mxu0 0
  %822 = vmatprep.subr.bf16.mxu0 0
  %823 = vmatpush2.bf16.msra.mxu0 0
  %824 = vmatprep.subr.bf16.mxu0 0
  %825 = vmatpush2.bf16.msra.mxu0 0
  %826 = vmatprep.mubr.bf16.mxu0 0
  %827 = vmatmul.mubr.bf16.gmra.mxu0 %v723
  %v828 = vpop.f32.mrf.mxu0
  %v829 = vadd.f32 %v694, %v828
  %v830 = vpop.f32.mrf.mxu0
  %v831 = vadd.f32 %v694, %v830
  %v832 = vpop.f32.mrf.mxu0
  %v833 = vadd.f32 %v699, %v832
  %v834 = vpop.f32.mrf.mxu0
  %v835 = vadd.f32 %v699, %v834
  %836 = vmatprep.mubr.bf16.mxu0 0
  %837 = vmatmul.mubr.bf16.gmra.mxu0 %v726
  %v838 = vpop.f32.mrf.mxu0
  %v839 = vadd.f32 %v704, %v838
  %v840 = vpop.f32.mrf.mxu0
  %v841 = vadd.f32 %v704, %v840
  %v842 = vpop.f32.mrf.mxu0
  %v843 = vadd.f32 %v709, %v842
  %v844 = vpop.f32.mrf.mxu0
  %v845 = vadd.f32 %v709, %v844
  %846 = vdwg.mxu0
  %vm847 = vcmp.gt.f32.partialorder %v776, 0.0
  %vm848 = vcmp.gt.f32.partialorder %v778, 0.0
  %vm849 = vcmp.gt.f32.partialorder %v829, 0.0
  %vm850 = vcmp.gt.f32.partialorder %v831, 0.0
  %vm851 = vcmp.gt.f32.partialorder %v780, 0.0
  %vm852 = vcmp.gt.f32.partialorder %v782, 0.0
  %vm853 = vcmp.gt.f32.partialorder %v833, 0.0
  %vm854 = vcmp.gt.f32.partialorder %v835, 0.0
  %vm855 = vcmp.gt.f32.partialorder %v786, 0.0
  %vm856 = vcmp.gt.f32.partialorder %v788, 0.0
  %vm857 = vcmp.gt.f32.partialorder %v839, 0.0
  %vm858 = vcmp.gt.f32.partialorder %v841, 0.0
  %vm859 = vcmp.gt.f32.partialorder %v790, 0.0
  %vm860 = vcmp.gt.f32.partialorder %v792, 0.0
  %vm861 = vcmp.gt.f32.partialorder %v843, 0.0
  %vm862 = vcmp.gt.f32.partialorder %v845, 0.0
  %v863 = vmin.f32 %v776, 0.0
  %v864 = vmin.f32 %v778, 0.0
  %v865 = vmin.f32 %v829, 0.0
  %v866 = vmin.f32 %v831, 0.0
  %v867 = vmin.f32 %v780, 0.0
  %v868 = vmin.f32 %v782, 0.0
  %v869 = vmin.f32 %v833, 0.0
  %v870 = vmin.f32 %v835, 0.0
  %v871 = vmin.f32 %v786, 0.0
  %v872 = vmin.f32 %v788, 0.0
  %v873 = vmin.f32 %v839, 0.0
  %v874 = vmin.f32 %v841, 0.0
  %v875 = vmin.f32 %v790, 0.0
  %v876 = vmin.f32 %v792, 0.0
  %v877 = vmin.f32 %v843, 0.0
  %v878 = vmin.f32 %v845, 0.0
  %v879 = vmul.f32 %v863, 1.442695
  %v880 = vpow.pop %v879
  %v881 = vmul.f32 %v864, 1.442695
  %v882 = vpow.pop %v881
  %v883 = vmul.f32 %v865, 1.442695
  %v884 = vpow.pop %v883
  %v885 = vmul.f32 %v866, 1.442695
  %v886 = vpow.pop %v885
  %v887 = vmul.f32 %v867, 1.442695
  %v888 = vpow.pop %v887
  %v889 = vmul.f32 %v868, 1.442695
  %v890 = vpow.pop %v889
  %v891 = vmul.f32 %v869, 1.442695
  %v892 = vpow.pop %v891
  %v893 = vmul.f32 %v870, 1.442695
  %v894 = vpow.pop %v893
  %v895 = vmul.f32 %v871, 1.442695
  %v896 = vpow.pop %v895
  %v897 = vmul.f32 %v872, 1.442695
  %v898 = vpow.pop %v897
  %v899 = vmul.f32 %v873, 1.442695
  %v900 = vpow.pop %v899
  %v901 = vmul.f32 %v874, 1.442695
  %v902 = vpow.pop %v901
  %v903 = vmul.f32 %v875, 1.442695
  %v904 = vpow.pop %v903
  %v905 = vmul.f32 %v876, 1.442695
  %v906 = vpow.pop %v905
  %v907 = vmul.f32 %v877, 1.442695
  %v908 = vpow.pop %v907
  %v909 = vmul.f32 %v878, 1.442695
  %v910 = vpow.pop %v909
  %v911 = vsub.f32 %v880, 1.0
  %v912 = vsub.f32 %v882, 1.0
  %v913 = vsub.f32 %v884, 1.0
  %v914 = vsub.f32 %v886, 1.0
  %v915 = vsub.f32 %v888, 1.0
  %v916 = vsub.f32 %v890, 1.0
  %v917 = vsub.f32 %v892, 1.0
  %v918 = vsub.f32 %v894, 1.0
  %v919 = vsub.f32 %v896, 1.0
  %v920 = vsub.f32 %v898, 1.0
  %v921 = vsub.f32 %v900, 1.0
  %v922 = vsub.f32 %v902, 1.0
  %v923 = vsub.f32 %v904, 1.0
  %v924 = vsub.f32 %v906, 1.0
  %v925 = vsub.f32 %v908, 1.0
  %v926 = vsub.f32 %v910, 1.0
  %v927 = vsel %vm847, %v776, %v911
  %v928 = vsel %vm848, %v778, %v912
  %v929 = vsel %vm849, %v829, %v913
  %v930 = vsel %vm850, %v831, %v914
  %v931 = vsel %vm851, %v780, %v915
  %v932 = vsel %vm852, %v782, %v916
  %v933 = vsel %vm853, %v833, %v917
  %v934 = vsel %vm854, %v835, %v918
  %v935 = vsel %vm855, %v786, %v919
  %v936 = vsel %vm856, %v788, %v920
  %v937 = vsel %vm857, %v839, %v921
  %v938 = vsel %vm858, %v841, %v922
  %v939 = vsel %vm859, %v790, %v923
  %v940 = vsel %vm860, %v792, %v924
  %v941 = vsel %vm861, %v843, %v925
  %v942 = vsel %vm862, %v845, %v926
  %v943 = vpack.c.bf16 %v931, %v927
  %v944 = vpack.c.bf16 %v932, %v928
  %v945 = vpack.c.bf16 %v933, %v929
  %v946 = vpack.c.bf16 %v934, %v930
  %v947 = vpack.c.bf16 %v939, %v935
  %v948 = vpack.c.bf16 %v940, %v936
  %v949 = vpack.c.bf16 %v941, %v937
  %v950 = vpack.c.bf16 %v942, %v938
  %v951 = vld [vmem:[%s2 + $0x38] sm:$0xf]
  %v952 = vld [vmem:[%s2 + $0x3c] sm:$0xf]
  %v953 = vld [vmem:[%s2 + $0x40] sm:$0xf]
  %v954 = vld [vmem:[%s2 + $0x44] sm:$0xf]
  %v955 = vld [vmem:[%s3 + $0x70] sm:$0xff]
  %v956 = vld [vmem:[%s3 + $0x78] sm:$0xff]
  %v957 = vld [vmem:[%s3 + $0x80] sm:$0xff]
  %v958 = vld [vmem:[%s3 + $0x88] sm:$0xff]
  %960 = vset.pattern.permute.xlu0 0
  %961 = vperm.xlu0 %960, %v955
  %v962 = vpop.permute.xlu0 %961
  %965 = vset.pattern.permute.xlu0 0
  %966 = vperm.xlu0 %965, %v956
  %v967 = vpop.permute.xlu0 %966
  %970 = vset.pattern.permute.xlu0 0
  %971 = vperm.xlu0 %970, %v957
  %v972 = vpop.permute.xlu0 %971
  %975 = vset.pattern.permute.xlu0 0
  %976 = vperm.xlu0 %975, %v958
  %v977 = vpop.permute.xlu0 %976
  %v983 = vunpack.c.l.b16 %v951
  %v984 = vunpack.c.l.b16 %v952
  %v985 = vunpack.c.l.b16 %v953
  %v986 = vunpack.c.l.b16 %v954
  %v987 = vpack.c.b16 %v984, %v983
  %v988 = vpack.c.b16 %v986, %v985
  %v990 = vsel %vm332, %v987, 0
  %v993 = vsel %vm332, %v988, 0
  %995 = vmatprep.subr.bf16.mxu0 0
  %996 = vmatpush1.bf16.msra.mxu0 0
  %997 = vmatprep.subr.bf16.mxu0 0
  %998 = vmatpush1.bf16.msra.mxu0 0
  %999 = vmatprep.subr.bf16.mxu0 0
  %1000 = vmatpush1.bf16.msra.mxu0 0
  %1001 = vmatprep.subr.bf16.mxu0 0
  %1002 = vmatpush1.bf16.msra.mxu0 0
  %1003 = vmatprep.subr.bf16.mxu0 0
  %1004 = vmatpush1.bf16.msra.mxu0 0
  %1005 = vmatprep.subr.bf16.mxu0 0
  %1006 = vmatpush1.bf16.msra.mxu0 0
  %1007 = vmatprep.subr.bf16.mxu0 %v948
  %1008 = vmatpush1.bf16.msra.mxu0 %v947
  %1009 = vmatprep.subr.bf16.mxu0 %v944
  %1010 = vmatpush1.bf16.msra.mxu0 %v943
  %1011 = vmatprep.subr.bf16.mxu0 0
  %1012 = vmatpush2.bf16.msra.mxu0 0
  %1013 = vmatprep.subr.bf16.mxu0 0
  %1014 = vmatpush2.bf16.msra.mxu0 0
  %1015 = vmatprep.subr.bf16.mxu0 0
  %1016 = vmatpush2.bf16.msra.mxu0 0
  %1017 = vmatprep.subr.bf16.mxu0 0
  %1018 = vmatpush2.bf16.msra.mxu0 0
  %1019 = vmatprep.subr.bf16.mxu0 0
  %1020 = vmatpush2.bf16.msra.mxu0 0
  %1021 = vmatprep.subr.bf16.mxu0 0
  %1022 = vmatpush2.bf16.msra.mxu0 0
  %1023 = vmatprep.subr.bf16.mxu0 0
  %1024 = vmatpush2.bf16.msra.mxu0 0
  %1025 = vmatprep.subr.bf16.mxu0 0
  %1026 = vmatpush2.bf16.msra.mxu0 0
  %1027 = vmatprep.mubr.bf16.mxu0 0
  %1028 = vmatmul.mubr.bf16.gmra.mxu0 %v990
  %v1029 = vpop.f32.mrf.mxu0
  %v1030 = vadd.f32 %v962, %v1029
  %v1031 = vpop.f32.mrf.mxu0
  %v1032 = vadd.f32 %v962, %v1031
  %v1033 = vpop.f32.mrf.mxu0
  %v1034 = vadd.f32 %v967, %v1033
  %v1035 = vpop.f32.mrf.mxu0
  %v1036 = vadd.f32 %v967, %v1035
  %1037 = vmatprep.mubr.bf16.mxu0 0
  %1038 = vmatmul.mubr.bf16.gmra.mxu0 %v993
  %v1039 = vpop.f32.mrf.mxu0
  %v1040 = vadd.f32 %v972, %v1039
  %v1041 = vpop.f32.mrf.mxu0
  %v1042 = vadd.f32 %v972, %v1041
  %v1043 = vpop.f32.mrf.mxu0
  %v1044 = vadd.f32 %v977, %v1043
  %v1045 = vpop.f32.mrf.mxu0
  %v1046 = vadd.f32 %v977, %v1045
  %1047 = vdwg.mxu0
  %1048 = vmatprep.subr.bf16.mxu0 0
  %1049 = vmatpush1.bf16.msra.mxu0 0
  %1050 = vmatprep.subr.bf16.mxu0 0
  %1051 = vmatpush1.bf16.msra.mxu0 0
  %1052 = vmatprep.subr.bf16.mxu0 0
  %1053 = vmatpush1.bf16.msra.mxu0 0
  %1054 = vmatprep.subr.bf16.mxu0 0
  %1055 = vmatpush1.bf16.msra.mxu0 0
  %1056 = vmatprep.subr.bf16.mxu0 0
  %1057 = vmatpush1.bf16.msra.mxu0 0
  %1058 = vmatprep.subr.bf16.mxu0 0
  %1059 = vmatpush1.bf16.msra.mxu0 0
  %1060 = vmatprep.subr.bf16.mxu0 %v950
  %1061 = vmatpush1.bf16.msra.mxu0 %v949
  %1062 = vmatprep.subr.bf16.mxu0 %v946
  %1063 = vmatpush1.bf16.msra.mxu0 %v945
  %1064 = vmatprep.subr.bf16.mxu0 0
  %1065 = vmatpush2.bf16.msra.mxu0 0
  %1066 = vmatprep.subr.bf16.mxu0 0
  %1067 = vmatpush2.bf16.msra.mxu0 0
  %1068 = vmatprep.subr.bf16.mxu0 0
  %1069 = vmatpush2.bf16.msra.mxu0 0
  %1070 = vmatprep.subr.bf16.mxu0 0
  %1071 = vmatpush2.bf16.msra.mxu0 0
  %1072 = vmatprep.subr.bf16.mxu0 0
  %1073 = vmatpush2.bf16.msra.mxu0 0
  %1074 = vmatprep.subr.bf16.mxu0 0
  %1075 = vmatpush2.bf16.msra.mxu0 0
  %1076 = vmatprep.subr.bf16.mxu0 0
  %1077 = vmatpush2.bf16.msra.mxu0 0
  %1078 = vmatprep.subr.bf16.mxu0 0
  %1079 = vmatpush2.bf16.msra.mxu0 0
  %1080 = vmatprep.mubr.bf16.mxu0 0
  %1081 = vmatmul.mubr.bf16.gmra.mxu0 %v990
  %v1082 = vpop.f32.mrf.mxu0
  %v1083 = vadd.f32 %v962, %v1082
  %v1084 = vpop.f32.mrf.mxu0
  %v1085 = vadd.f32 %v962, %v1084
  %v1086 = vpop.f32.mrf.mxu0
  %v1087 = vadd.f32 %v967, %v1086
  %v1088 = vpop.f32.mrf.mxu0
  %v1089 = vadd.f32 %v967, %v1088
  %1090 = vmatprep.mubr.bf16.mxu0 0
  %1091 = vmatmul.mubr.bf16.gmra.mxu0 %v993
  %v1092 = vpop.f32.mrf.mxu0
  %v1093 = vadd.f32 %v972, %v1092
  %v1094 = vpop.f32.mrf.mxu0
  %v1095 = vadd.f32 %v972, %v1094
  %v1096 = vpop.f32.mrf.mxu0
  %v1097 = vadd.f32 %v977, %v1096
  %v1098 = vpop.f32.mrf.mxu0
  %v1099 = vadd.f32 %v977, %v1098
  %1100 = vdwg.mxu0
  %vm1101 = vcmp.gt.f32.partialorder %v1030, 0.0
  %vm1102 = vcmp.gt.f32.partialorder %v1032, 0.0
  %vm1103 = vcmp.gt.f32.partialorder %v1083, 0.0
  %vm1104 = vcmp.gt.f32.partialorder %v1085, 0.0
  %vm1105 = vcmp.gt.f32.partialorder %v1034, 0.0
  %vm1106 = vcmp.gt.f32.partialorder %v1036, 0.0
  %vm1107 = vcmp.gt.f32.partialorder %v1087, 0.0
  %vm1108 = vcmp.gt.f32.partialorder %v1089, 0.0
  %vm1109 = vcmp.gt.f32.partialorder %v1040, 0.0
  %vm1110 = vcmp.gt.f32.partialorder %v1042, 0.0
  %vm1111 = vcmp.gt.f32.partialorder %v1093, 0.0
  %vm1112 = vcmp.gt.f32.partialorder %v1095, 0.0
  %vm1113 = vcmp.gt.f32.partialorder %v1044, 0.0
  %vm1114 = vcmp.gt.f32.partialorder %v1046, 0.0
  %vm1115 = vcmp.gt.f32.partialorder %v1097, 0.0
  %vm1116 = vcmp.gt.f32.partialorder %v1099, 0.0
  %v1117 = vmin.f32 %v1030, 0.0
  %v1118 = vmin.f32 %v1032, 0.0
  %v1119 = vmin.f32 %v1083, 0.0
  %v1120 = vmin.f32 %v1085, 0.0
  %v1121 = vmin.f32 %v1034, 0.0
  %v1122 = vmin.f32 %v1036, 0.0
  %v1123 = vmin.f32 %v1087, 0.0
  %v1124 = vmin.f32 %v1089, 0.0
  %v1125 = vmin.f32 %v1040, 0.0
  %v1126 = vmin.f32 %v1042, 0.0
  %v1127 = vmin.f32 %v1093, 0.0
  %v1128 = vmin.f32 %v1095, 0.0
  %v1129 = vmin.f32 %v1044, 0.0
  %v1130 = vmin.f32 %v1046, 0.0
  %v1131 = vmin.f32 %v1097, 0.0
  %v1132 = vmin.f32 %v1099, 0.0
  %v1133 = vmul.f32 %v1117, 1.442695
  %v1134 = vpow.pop %v1133
  %v1135 = vmul.f32 %v1118, 1.442695
  %v1136 = vpow.pop %v1135
  %v1137 = vmul.f32 %v1119, 1.442695
  %v1138 = vpow.pop %v1137
  %v1139 = vmul.f32 %v1120, 1.442695
  %v1140 = vpow.pop %v1139
  %v1141 = vmul.f32 %v1121, 1.442695
  %v1142 = vpow.pop %v1141
  %v1143 = vmul.f32 %v1122, 1.442695
  %v1144 = vpow.pop %v1143
  %v1145 = vmul.f32 %v1123, 1.442695
  %v1146 = vpow.pop %v1145
  %v1147 = vmul.f32 %v1124, 1.442695
  %v1148 = vpow.pop %v1147
  %v1149 = vmul.f32 %v1125, 1.442695
  %v1150 = vpow.pop %v1149
  %v1151 = vmul.f32 %v1126, 1.442695
  %v1152 = vpow.pop %v1151
  %v1153 = vmul.f32 %v1127, 1.442695
  %v1154 = vpow.pop %v1153
  %v1155 = vmul.f32 %v1128, 1.442695
  %v1156 = vpow.pop %v1155
  %v1157 = vmul.f32 %v1129, 1.442695
  %v1158 = vpow.pop %v1157
  %v1159 = vmul.f32 %v1130, 1.442695
  %v1160 = vpow.pop %v1159
  %v1161 = vmul.f32 %v1131, 1.442695
  %v1162 = vpow.pop %v1161
  %v1163 = vmul.f32 %v1132, 1.442695
  %v1164 = vpow.pop %v1163
  %v1165 = vsub.f32 %v1134, 1.0
  %v1166 = vsub.f32 %v1136, 1.0
  %v1167 = vsub.f32 %v1138, 1.0
  %v1168 = vsub.f32 %v1140, 1.0
  %v1169 = vsub.f32 %v1142, 1.0
  %v1170 = vsub.f32 %v1144, 1.0
  %v1171 = vsub.f32 %v1146, 1.0
  %v1172 = vsub.f32 %v1148, 1.0
  %v1173 = vsub.f32 %v1150, 1.0
  %v1174 = vsub.f32 %v1152, 1.0
  %v1175 = vsub.f32 %v1154, 1.0
  %v1176 = vsub.f32 %v1156, 1.0
  %v1177 = vsub.f32 %v1158, 1.0
  %v1178 = vsub.f32 %v1160, 1.0
  %v1179 = vsub.f32 %v1162, 1.0
  %v1180 = vsub.f32 %v1164, 1.0
  %v1181 = vsel %vm1101, %v1030, %v1165
  %v1182 = vsel %vm1102, %v1032, %v1166
  %v1183 = vsel %vm1103, %v1083, %v1167
  %v1184 = vsel %vm1104, %v1085, %v1168
  %v1185 = vsel %vm1105, %v1034, %v1169
  %v1186 = vsel %vm1106, %v1036, %v1170
  %v1187 = vsel %vm1107, %v1087, %v1171
  %v1188 = vsel %vm1108, %v1089, %v1172
  %v1189 = vsel %vm1109, %v1040, %v1173
  %v1190 = vsel %vm1110, %v1042, %v1174
  %v1191 = vsel %vm1111, %v1093, %v1175
  %v1192 = vsel %vm1112, %v1095, %v1176
  %v1193 = vsel %vm1113, %v1044, %v1177
  %v1194 = vsel %vm1114, %v1046, %v1178
  %v1195 = vsel %vm1115, %v1097, %v1179
  %v1196 = vsel %vm1116, %v1099, %v1180
  %v1197 = vpack.c.bf16 %v1185, %v1181
  %v1198 = vpack.c.bf16 %v1186, %v1182
  %v1199 = vpack.c.bf16 %v1187, %v1183
  %v1200 = vpack.c.bf16 %v1188, %v1184
  %v1201 = vpack.c.bf16 %v1193, %v1189
  %v1202 = vpack.c.bf16 %v1194, %v1190
  %v1203 = vpack.c.bf16 %v1195, %v1191
  %v1204 = vpack.c.bf16 %v1196, %v1192
  %v1205 = vld [vmem:[%s2 + $0x48] sm:$0xf]
  %v1206 = vld [vmem:[%s2 + $0x4c] sm:$0xf]
  %v1207 = vld [vmem:[%s3 + $0x90] sm:$0xff]
  %v1208 = vld [vmem:[%s3 + $0x98] sm:$0xff]
  %1210 = vset.pattern.permute.xlu0 0
  %1211 = vperm.xlu0 %1210, %v1207
  %v1212 = vpop.permute.xlu0 %1211
  %1215 = vset.pattern.permute.xlu0 0
  %1216 = vperm.xlu0 %1215, %v1208
  %v1217 = vpop.permute.xlu0 %1216
  %v1221 = vunpack.c.l.b16 %v1205
  %v1222 = vunpack.c.l.b16 %v1206
  %v1223 = vpack.c.b16 %v1222, %v1221
  %v1225 = vsel %vm332, %v1223, 0
  %1227 = vmatprep.subr.bf16.mxu0 0
  %1228 = vmatpush1.bf16.msra.mxu0 0
  %1229 = vmatprep.subr.bf16.mxu0 0
  %1230 = vmatpush1.bf16.msra.mxu0 0
  %1231 = vmatprep.subr.bf16.mxu0 0
  %1232 = vmatpush1.bf16.msra.mxu0 0
  %1233 = vmatprep.subr.bf16.mxu0 0
  %1234 = vmatpush1.bf16.msra.mxu0 0
  %1235 = vmatprep.subr.bf16.mxu0 0
  %1236 = vmatpush1.bf16.msra.mxu0 0
  %1237 = vmatprep.subr.bf16.mxu0 0
  %1238 = vmatpush1.bf16.msra.mxu0 0
  %1239 = vmatprep.subr.bf16.mxu0 %v1202
  %1240 = vmatpush1.bf16.msra.mxu0 %v1201
  %1241 = vmatprep.subr.bf16.mxu0 %v1198
  %1242 = vmatpush1.bf16.msra.mxu0 %v1197
  %1243 = vmatprep.subr.bf16.mxu0 0
  %1244 = vmatpush2.bf16.msra.mxu0 0
  %1245 = vmatprep.subr.bf16.mxu0 0
  %1246 = vmatpush2.bf16.msra.mxu0 0
  %1247 = vmatprep.subr.bf16.mxu0 0
  %1248 = vmatpush2.bf16.msra.mxu0 0
  %1249 = vmatprep.subr.bf16.mxu0 0
  %1250 = vmatpush2.bf16.msra.mxu0 0
  %1251 = vmatprep.subr.bf16.mxu0 0
  %1252 = vmatpush2.bf16.msra.mxu0 0
  %1253 = vmatprep.subr.bf16.mxu0 0
  %1254 = vmatpush2.bf16.msra.mxu0 0
  %1255 = vmatprep.subr.bf16.mxu0 0
  %1256 = vmatpush2.bf16.msra.mxu0 0
  %1257 = vmatprep.subr.bf16.mxu0 0
  %1258 = vmatpush2.bf16.msra.mxu0 0
  %1259 = vmatprep.mubr.bf16.mxu0 0
  %1260 = vmatmul.mubr.bf16.gmra.mxu0 %v1225
  %v1261 = vpop.f32.mrf.mxu0
  %v1262 = vadd.f32 %v1212, %v1261
  %v1263 = vpop.f32.mrf.mxu0
  %v1264 = vadd.f32 %v1212, %v1263
  %v1265 = vpop.f32.mrf.mxu0
  %v1266 = vadd.f32 %v1217, %v1265
  %v1267 = vpop.f32.mrf.mxu0
  %v1268 = vadd.f32 %v1217, %v1267
  %1269 = vdwg.mxu0
  %1270 = vmatprep.subr.bf16.mxu0 0
  %1271 = vmatpush1.bf16.msra.mxu0 0
  %1272 = vmatprep.subr.bf16.mxu0 0
  %1273 = vmatpush1.bf16.msra.mxu0 0
  %1274 = vmatprep.subr.bf16.mxu0 0
  %1275 = vmatpush1.bf16.msra.mxu0 0
  %1276 = vmatprep.subr.bf16.mxu0 0
  %1277 = vmatpush1.bf16.msra.mxu0 0
  %1278 = vmatprep.subr.bf16.mxu0 0
  %1279 = vmatpush1.bf16.msra.mxu0 0
  %1280 = vmatprep.subr.bf16.mxu0 0
  %1281 = vmatpush1.bf16.msra.mxu0 0
  %1282 = vmatprep.subr.bf16.mxu0 %v1204
  %1283 = vmatpush1.bf16.msra.mxu0 %v1203
  %1284 = vmatprep.subr.bf16.mxu0 %v1200
  %1285 = vmatpush1.bf16.msra.mxu0 %v1199
  %1286 = vmatprep.subr.bf16.mxu0 0
  %1287 = vmatpush2.bf16.msra.mxu0 0
  %1288 = vmatprep.subr.bf16.mxu0 0
  %1289 = vmatpush2.bf16.msra.mxu0 0
  %1290 = vmatprep.subr.bf16.mxu0 0
  %1291 = vmatpush2.bf16.msra.mxu0 0
  %1292 = vmatprep.subr.bf16.mxu0 0
  %1293 = vmatpush2.bf16.msra.mxu0 0
  %1294 = vmatprep.subr.bf16.mxu0 0
  %1295 = vmatpush2.bf16.msra.mxu0 0
  %1296 = vmatprep.subr.bf16.mxu0 0
  %1297 = vmatpush2.bf16.msra.mxu0 0
  %1298 = vmatprep.subr.bf16.mxu0 0
  %1299 = vmatpush2.bf16.msra.mxu0 0
  %1300 = vmatprep.subr.bf16.mxu0 0
  %1301 = vmatpush2.bf16.msra.mxu0 0
  %1302 = vmatprep.mubr.bf16.mxu0 0
  %1303 = vmatmul.mubr.bf16.gmra.mxu0 %v1225
  %v1304 = vpop.f32.mrf.mxu0
  %v1305 = vadd.f32 %v1212, %v1304
  %v1306 = vpop.f32.mrf.mxu0
  %v1307 = vadd.f32 %v1212, %v1306
  %v1308 = vpop.f32.mrf.mxu0
  %v1309 = vadd.f32 %v1217, %v1308
  %v1310 = vpop.f32.mrf.mxu0
  %v1311 = vadd.f32 %v1217, %v1310
  %1312 = vdwg.mxu0
  %1313 = vst [vmem:[%s4 + $0x20] sm:$0xff] %v1262
  %1314 = vst [vmem:[%s4 + $0x28] sm:$0xff] %v1264
  %1315 = vst [vmem:[%s4 + $0x30] sm:$0xff] %v1305
  %1316 = vst [vmem:[%s4 + $0x38] sm:$0xff] %v1307
  %v1317 = vmul.f32 %v1266, 1.442695
  %v1318 = vpow.pop %v1317
  %v1319 = vmul.f32 %v1268, 1.442695
  %v1320 = vpow.pop %v1319
  %v1321 = vmul.f32 %v1309, 1.442695
  %v1322 = vpow.pop %v1321
  %v1323 = vmul.f32 %v1311, 1.442695
  %v1324 = vpow.pop %v1323
  %1325 = vst [vmem:[%s4 + $0x40] sm:$0xff] %v1318
  %1326 = vst [vmem:[%s4 + $0x48] sm:$0xff] %v1320
  %1327 = vst [vmem:[%s4 + $0x50] sm:$0xff] %v1322
  %1328 = vst [vmem:[%s4 + $0x58] sm:$0xff] %v1324
  // Predicated region
  $region18: #{vae_forward.1} parent=0 // pred_check
    _
  $region19: #{vae_forward.1} parent=0 // pred_check_branch
    %1330 = sbr.rel (0) target = $region21
  $region20: #{vae_forward.1} parent=0 // pred_region
    _
  $region21: #{vae_forward.1} parent=0 // pred_fallthru
    _
  // Predicated region
  $region22: #{vae_forward.1} parent=0 // pred_check
    _
  $region23: #{vae_forward.1} parent=0 // pred_check_branch
    %1332 = sbr.rel (0) target = $region25
  $region24: #{vae_forward.1} parent=0 // pred_region
    _
  $region25: #{vae_forward.1} parent=0 // pred_fallthru
    _

</llo_original>
